<compile_context>
chip_gen: v6e
topology: v6e:2x2x1
jax: 0.10.0
libtpu: 0.0.40
codegen_flags: <defaults>
</compile_context>

<pallas_src>
import functools

import jax
import jax.numpy as jnp
from jax import lax
from jax.experimental import pallas as pl
from jax.experimental.pallas import tpu as pltpu


# ---------------------------------------------------------------------------
# In-kernel helpers (traced inside the Pallas kernel body)
# ---------------------------------------------------------------------------
def _layernorm_channels(x, w, b, eps=1e-5):
    """WithBias_LayerNorm over the channel (sublane, axis 0) dimension.

    x: (C, HW); w, b: (C, 1).  Matches torch: (x - mu) / sqrt(var + eps) * w + b
    with biased (unbiased=False) variance.
    """
    mu = jnp.mean(x, axis=0, keepdims=True)                       # (1, HW)
    var = jnp.mean((x - mu) ** 2, axis=0, keepdims=True)          # (1, HW)
    return (x - mu) * lax.rsqrt(var + eps) * w + b


def _l2_normalize_rows(x, eps=1e-12):
    """torch.nn.functional.normalize along the HW (lane) axis, per channel row."""
    ss = jnp.sum(x * x, axis=1, keepdims=True)                    # (rows, 1)
    return x * lax.rsqrt(jnp.maximum(ss, eps * eps))              # == x / max(||x||, eps)


def _matmul_gated(w, y):
    """(Cout, Cin) @ (Cin, HW): MXU for Cin >= 16, rank-1 VPU FMAs for tiny K.

    At toy widths (Cin <= 8) the rank-1 path avoids feeding nearly-empty K passes to the
    MXU; at real Restormer widths the same call sites go to jnp.dot automatically.
    """
    _, cin = w.shape
    if cin >= 16:
        return jnp.dot(w, y, preferred_element_type=jnp.float32)
    out = w[:, 0:1] * y[0:1, :]
    for c in range(1, cin):
        out = out + w[:, c:c + 1] * y[c:c + 1, :]
    return out


def _dwconv3x3(x, w_taps, row_m1, row_p1, col_m1, col_p1, W):
    """Factored depthwise 3x3 conv (stride 1, zero pad 1, groups=channels) on the
    row-major flattened HW lane axis.

    Row-premask the dy=+-1 rolled copies once, accumulate each dx column over dy, then
    lane-shift and column-mask each column once: 4 XLU rolls + ~21 VALU passes.
    (The row mask is evaluated at the pre-column-shift index; the only lanes where it
    differs from the output-index row mask are lanes the column mask zeroes anyway.)

    x:      (Cx, HW)
    w_taps: (Cx, 9)   tap index t = ky*3 + kx   (== torch weight[c, 0, ky, kx])
    masks:  (1, HW)   each, host-precomputed (shared by both dwconvs)
    """
    HW = x.shape[1]
    x_up = pltpu.roll(x, W, axis=1) * row_m1           # accesses row y-1 (ky = 0)
    x_dn = pltpu.roll(x, HW - W, axis=1) * row_p1      # accesses row y+1 (ky = 2)

    def col(kx):                                       # dx = kx - 1, summed over ky
        return (x_up * w_taps[:, kx:kx + 1]
                + x * w_taps[:, 3 + kx:4 + kx]
                + x_dn * w_taps[:, 6 + kx:7 + kx])

    out = col(1)                                                    # dx = 0
    out = out + pltpu.roll(col(0), 1, axis=1) * col_m1              # dx = -1
    out = out + pltpu.roll(col(2), HW - 1, axis=1) * col_p1         # dx = +1
    return out


# ---------------------------------------------------------------------------
# The Pallas kernel: one image (one grid step along the parallel batch axis)
# ---------------------------------------------------------------------------
def transformer_block_kernel(W, num_heads,
                             x_ref, mask_ref,
                             ln1_w_ref, ln1_b_ref,
                             w_qkv_ref, w_dw_qkv_ref, temp_ref, w_proj_ref,
                             ln2_w_ref, ln2_b_ref,
                             w_pi_ref, w_dw_ffn_ref, w_po_ref,
                             out_ref):
    masks = mask_ref[...]                               # (4, HW)
    row_m1, row_p1 = masks[0:1, :], masks[1:2, :]
    col_m1, col_p1 = masks[2:3, :], masks[3:4, :]

    ln1_w, ln1_b = ln1_w_ref[...], ln1_b_ref[...]
    ln2_w, ln2_b = ln2_w_ref[...], ln2_b_ref[...]
    w_qkv, w_dw_qkv = w_qkv_ref[...], w_dw_qkv_ref[...]
    temp = temp_ref[...]                                # (num_heads, 1)
    w_proj = w_proj_ref[...]
    w_pi, w_dw_ffn, w_po = w_pi_ref[...], w_dw_ffn_ref[...], w_po_ref[...]

    C = ln1_w.shape[0]
    cp = C // num_heads
    hid = w_po.shape[1]

    x = x_ref[...]                                      # (C, HW), HW on lanes

    # ---------------- attention branch: x = x + attn(norm1(x)) ----------------
    y = _layernorm_channels(x, ln1_w, ln1_b)
    qkv = _matmul_gated(w_qkv, y)                       # 1x1 conv -> (3C, HW)
    qkv = _dwconv3x3(qkv, w_dw_qkv, row_m1, row_p1, col_m1, col_p1, W)
    # NOTE: at toy C=4 these slices are not 8-sublane aligned (small relayout copies);
    # padding 3C -> 24 rows would 1.5x the dwconv VALU work, so keep the compact layout.
    q = qkv[0:C]
    k = qkv[C:2 * C]
    v = qkv[2 * C:3 * C]

    # Per-head Gram / softmax / apply (MXU for the K=HW contraction, EUP for exp/recip).
    out_heads = []
    for h in range(num_heads):
        sl = slice(h * cp, (h + 1) * cp)
        qh = _l2_normalize_rows(q[sl])
        kh = _l2_normalize_rows(k[sl])
        gram = lax.dot_general(qh, kh, (((1,), (1,)), ((), ())),
                               preferred_element_type=jnp.float32)   # (cp, cp)
        s = gram * temp[h:h + 1, :]                                   # per-head temperature
        m = jnp.max(s, axis=1, keepdims=True)
        e = jnp.exp(s - m)
        attn = e * pl.reciprocal(jnp.sum(e, axis=1, keepdims=True), approx=True)
        out_heads.append(_matmul_gated(attn, v[sl]))                  # (cp, HW)
    out_attn = jnp.concatenate(out_heads, axis=0)                     # (C, HW)
    x = x + _matmul_gated(w_proj, out_attn)

    # ---------------- feed-forward branch: x = x + ffn(norm2(x)) ---------------
    y = _layernorm_channels(x, ln2_w, ln2_b)
    hfd = _matmul_gated(w_pi, y)                        # (2*hid, HW)
    hfd = _dwconv3x3(hfd, w_dw_ffn, row_m1, row_p1, col_m1, col_p1, W)
    x1 = hfd[0:hid]
    x2 = hfd[hid:2 * hid]
    # TODO(synk): tanh/sigmoid GELU would move this chain from the VALU to the EUP at a
    # ~1e-3 numerics delta vs torch's exact-erf F.gelu; keep exact erf to match the spec.
    g = 0.5 * x1 * (1.0 + lax.erf(x1 * 0.7071067811865476))
    x = x + _matmul_gated(w_po, g * x2)

    out_ref[...] = x


# ---------------------------------------------------------------------------
# Wrapper: layout plumbing + host-precomputed tables + pallas_call (grid over batch)
# ---------------------------------------------------------------------------
def transformer_block(x_nchw, prm, num_heads):
    B, C, H, W = x_nchw.shape
    HW = H * W
    assert HW % 128 == 0, "flattened H*W must be a multiple of 128 (pad image otherwise)"
    hid = prm["w_po"].shape[1]

    # NCHW -> (B, C, HW): pure reshape (row-major flatten), HW lands on the lane axis.
    x3d = x_nchw.reshape(B, C, HW).astype(jnp.float32)

    # Host-precomputed factored dwconv boundary masks (shared by both dwconvs).
    ys = jnp.arange(HW, dtype=jnp.int32) // W
    xs = jnp.arange(HW, dtype=jnp.int32) % W
    dw_mask = jnp.stack([
        (ys >= 1).astype(jnp.float32),         # row mask for dy = -1
        (ys <= H - 2).astype(jnp.float32),     # row mask for dy = +1
        (xs >= 1).astype(jnp.float32),         # col mask for dx = -1
        (xs <= W - 2).astype(jnp.float32),     # col mask for dx = +1
    ], axis=0)                                 # (4, HW)

    # Per-head temperature as a (num_heads, 1) column (indexed per head in the kernel).
    temp = prm["temperature"].astype(jnp.float32).reshape(num_heads, 1)

    def full(shape):
        return pl.BlockSpec(shape, lambda b, _s=shape: (0,) * len(_s))

    in_specs = [
        pl.BlockSpec((None, C, HW), lambda b: (b, 0, 0)),   # x: one image per grid step
        full((4, HW)),                                      # dwconv masks
        full((C, 1)), full((C, 1)),                         # ln1 weight / bias
        full((3 * C, C)), full((3 * C, 9)),                 # w_qkv, w_dw_qkv
        full((num_heads, 1)),                               # temperature
        full((C, C)),                                       # w_proj
        full((C, 1)), full((C, 1)),                         # ln2 weight / bias
        full((2 * hid, C)), full((2 * hid, 9)),             # w_pi, w_dw_ffn
        full((C, hid)),                                     # w_po
    ]

    out3d = pl.pallas_call(
        functools.partial(transformer_block_kernel, W, num_heads),
        out_shape=jax.ShapeDtypeStruct((B, C, HW), jnp.float32),
        grid=(B,),
        in_specs=in_specs,
        out_specs=pl.BlockSpec((None, C, HW), lambda b: (b, 0, 0)),
        compiler_params=pltpu.CompilerParams(
            dimension_semantics=("parallel",)),             # megacore sharding on v7x
    )(x3d, dw_mask,
      prm["ln1_w"], prm["ln1_b"],
      prm["w_qkv"], prm["w_dw_qkv"], temp, prm["w_proj"],
      prm["ln2_w"], prm["ln2_b"],
      prm["w_pi"], prm["w_dw_ffn"], prm["w_po"])

    return out3d.reshape(B, C, H, W)


# ---------------------------------------------------------------------------
# Pure-JAX reference (mirrors the PyTorch module) for an in-script correctness check
# ---------------------------------------------------------------------------
def reference_transformer_block(x, prm, num_heads):
    B, C, H, W = x.shape
    HW = H * W
    cp = C // num_heads
    hp = jax.lax.Precision.HIGHEST

    def layer_norm(x4, w, b):
        t = x4.reshape(B, C, HW).transpose(0, 2, 1)                # (B, HW, C)
        mu = jnp.mean(t, axis=-1, keepdims=True)
        var = jnp.mean((t - mu) ** 2, axis=-1, keepdims=True)
        t = (t - mu) / jnp.sqrt(var + 1e-5) * w.reshape(1, 1, C) + b.reshape(1, 1, C)
        return t.transpose(0, 2, 1).reshape(B, C, H, W)

    def conv1x1(x4, w):                                            # w: (Cout, Cin)
        return jnp.einsum("oc,bchw->bohw", w, x4, precision=hp)

    def dwconv3x3(x4, w):                                          # w: (Cx, 9)
        xp = jnp.pad(x4, ((0, 0), (0, 0), (1, 1), (1, 1)))
        acc = jnp.zeros_like(x4)
        for ky in range(3):
            for kx in range(3):
                acc = acc + xp[:, :, ky:ky + H, kx:kx + W] * w[None, :, ky * 3 + kx, None, None]
        return acc

    def attention(x4):
        qkv = dwconv3x3(conv1x1(x4, prm["w_qkv"]), prm["w_dw_qkv"])
        q, k, v = jnp.split(qkv, 3, axis=1)
        to_heads = lambda t: t.reshape(B, num_heads, cp, HW)
        q, k, v = to_heads(q), to_heads(k), to_heads(v)
        qn = q / jnp.maximum(jnp.sqrt(jnp.sum(q * q, -1, keepdims=True)), 1e-12)
        kn = k / jnp.maximum(jnp.sqrt(jnp.sum(k * k, -1, keepdims=True)), 1e-12)
        logits = jnp.einsum("bhcn,bhdn->bhcd", qn, kn, precision=hp)
        logits = logits * prm["temperature"][None, :, None, None]
        attnw = jax.nn.softmax(logits, axis=-1)
        out = jnp.einsum("bhcd,bhdn->bhcn", attnw, v, precision=hp).reshape(B, C, H, W)
        return conv1x1(out, prm["w_proj"])

    def ffn(x4):
        h = dwconv3x3(conv1x1(x4, prm["w_pi"]), prm["w_dw_ffn"])
        x1, x2 = jnp.split(h, 2, axis=1)
        g = 0.5 * x1 * (1.0 + lax.erf(x1 * 0.7071067811865476))
        return conv1x1(g * x2, prm["w_po"])

    x = x + attention(layer_norm(x, prm["ln1_w"], prm["ln1_b"]))
    x = x + ffn(layer_norm(x, prm["ln2_w"], prm["ln2_b"]))
    return x


# ---------------------------------------------------------------------------
# Deterministic synthetic parameters + smoke / correctness test
# ---------------------------------------------------------------------------
if __name__ == "__main__":
    B, C, H, W = 2, 4, 16, 16
    num_heads = 2
    ffn_expansion_factor = 2.0
    hidden = int(C * ffn_expansion_factor)          # 8
    # bias=False, LayerNorm_type='WithBias'

    key = jax.random.PRNGKey(0)
    ks = jax.random.split(key, 12)
    x = jax.random.normal(ks[0], (B, C, H, W), jnp.float32)

    prm = dict(
        # LayerNorm affine params as (C, 1) sublane columns
        ln1_w=1.0 + 0.1 * jax.random.normal(ks[1], (C, 1), jnp.float32),
        ln1_b=0.1 * jax.random.normal(ks[2], (C, 1), jnp.float32),
        ln2_w=1.0 + 0.1 * jax.random.normal(ks[3], (C, 1), jnp.float32),
        ln2_b=0.1 * jax.random.normal(ks[4], (C, 1), jnp.float32),
        # 1x1 conv weights stored as (Cout, Cin) == torch_weight[:, :, 0, 0]
        w_qkv=0.1 * jax.random.normal(ks[5], (3 * C, C), jnp.float32),
        w_proj=0.1 * jax.random.normal(ks[6], (C, C), jnp.float32),
        w_pi=0.1 * jax.random.normal(ks[7], (2 * hidden, C), jnp.float32),
        w_po=0.1 * jax.random.normal(ks[8], (C, hidden), jnp.float32),
        # depthwise 3x3 weights stored as (channels, 9 taps); tap = ky*3 + kx
        w_dw_qkv=0.1 * jax.random.normal(ks[9], (3 * C, 9), jnp.float32),
        w_dw_ffn=0.1 * jax.random.normal(ks[10], (2 * hidden, 9), jnp.float32),
        # temperature: nn.Parameter of shape (num_heads, 1, 1) -> per-head scalars
        temperature=1.0 + 0.5 * jnp.arange(num_heads, dtype=jnp.float32),
    )

    out = transformer_block(x, prm, num_heads)
    jax.block_until_ready(out)

    ref = reference_transformer_block(x, prm, num_heads)
    err = float(jnp.max(jnp.abs(out - ref)))

    assert out.shape == (B, C, H, W)
    assert bool(jnp.all(jnp.isfinite(out)))
    assert err < 2e-3, f"kernel vs pure-JAX reference max abs error = {err}"
    print("KERNEL_OK")
</pallas_src>

<mosaic_0001>
module attributes {stable_mosaic.version = 11 : i64} {
  func.func @transformer_block_kernel(%arg0: i32, %arg1: memref<1x4x256xf32, #tpu.memory_space<vmem>>, %arg2: memref<4x256xf32, #tpu.memory_space<vmem>>, %arg3: memref<4x1xf32, #tpu.memory_space<vmem>>, %arg4: memref<4x1xf32, #tpu.memory_space<vmem>>, %arg5: memref<12x4xf32, #tpu.memory_space<vmem>>, %arg6: memref<12x9xf32, #tpu.memory_space<vmem>>, %arg7: memref<2x1xf32, #tpu.memory_space<vmem>>, %arg8: memref<4x4xf32, #tpu.memory_space<vmem>>, %arg9: memref<4x1xf32, #tpu.memory_space<vmem>>, %arg10: memref<4x1xf32, #tpu.memory_space<vmem>>, %arg11: memref<16x4xf32, #tpu.memory_space<vmem>>, %arg12: memref<16x9xf32, #tpu.memory_space<vmem>>, %arg13: memref<4x8xf32, #tpu.memory_space<vmem>>, %arg14: memref<1x4x256xf32, #tpu.memory_space<vmem>>) attributes {dimension_semantics = [#tpu.dimension_semantics<parallel>], iteration_bounds = array<i64: 2>, scalar_prefetch = 0 : i64, scratch_operands = 0 : i64, tpu.core_type = #tpu.core_type<tc>, window_params = [{transform_indices = @transform_0, window_bounds = array<i64: 1, 4, 256>}, {pipeline_mode = #tpu.pipeline_mode<synchronous>, transform_indices = @transform_1, window_bounds = array<i64: 4, 256>}, {pipeline_mode = #tpu.pipeline_mode<synchronous>, transform_indices = @transform_2, window_bounds = array<i64: 4, 1>}, {pipeline_mode = #tpu.pipeline_mode<synchronous>, transform_indices = @transform_3, window_bounds = array<i64: 4, 1>}, {pipeline_mode = #tpu.pipeline_mode<synchronous>, transform_indices = @transform_4, window_bounds = array<i64: 12, 4>}, {pipeline_mode = #tpu.pipeline_mode<synchronous>, transform_indices = @transform_5, window_bounds = array<i64: 12, 9>}, {pipeline_mode = #tpu.pipeline_mode<synchronous>, transform_indices = @transform_6, window_bounds = array<i64: 2, 1>}, {pipeline_mode = #tpu.pipeline_mode<synchronous>, transform_indices = @transform_7, window_bounds = array<i64: 4, 4>}, {pipeline_mode = #tpu.pipeline_mode<synchronous>, transform_indices = @transform_8, window_bounds = array<i64: 4, 1>}, {pipeline_mode = #tpu.pipeline_mode<synchronous>, transform_indices = @transform_9, window_bounds = array<i64: 4, 1>}, {pipeline_mode = #tpu.pipeline_mode<synchronous>, transform_indices = @transform_10, window_bounds = array<i64: 16, 4>}, {pipeline_mode = #tpu.pipeline_mode<synchronous>, transform_indices = @transform_11, window_bounds = array<i64: 16, 9>}, {pipeline_mode = #tpu.pipeline_mode<synchronous>, transform_indices = @transform_12, window_bounds = array<i64: 4, 8>}, {transform_indices = @transform_13, window_bounds = array<i64: 1, 4, 256>}]} {
    %c0 = arith.constant 0 : index
    %c0_0 = arith.constant 0 : index
    %0 = vector.load %arg2[%c0, %c0_0] : memref<4x256xf32, #tpu.memory_space<vmem>>, vector<4x256xf32>
    %1 = vector.extract_strided_slice %0 {offsets = [0, 0], sizes = [1, 256], strides = [1, 1]} : vector<4x256xf32> to vector<1x256xf32>
    %2 = vector.extract_strided_slice %0 {offsets = [1, 0], sizes = [1, 256], strides = [1, 1]} : vector<4x256xf32> to vector<1x256xf32>
    %3 = vector.extract_strided_slice %0 {offsets = [2, 0], sizes = [1, 256], strides = [1, 1]} : vector<4x256xf32> to vector<1x256xf32>
    %4 = vector.extract_strided_slice %0 {offsets = [3, 0], sizes = [1, 256], strides = [1, 1]} : vector<4x256xf32> to vector<1x256xf32>
    %c0_1 = arith.constant 0 : index
    %c0_2 = arith.constant 0 : index
    %5 = vector.load %arg3[%c0_1, %c0_2] : memref<4x1xf32, #tpu.memory_space<vmem>>, vector<4x1xf32>
    %c0_3 = arith.constant 0 : index
    %c0_4 = arith.constant 0 : index
    %6 = vector.load %arg4[%c0_3, %c0_4] : memref<4x1xf32, #tpu.memory_space<vmem>>, vector<4x1xf32>
    %c0_5 = arith.constant 0 : index
    %c0_6 = arith.constant 0 : index
    %7 = vector.load %arg9[%c0_5, %c0_6] : memref<4x1xf32, #tpu.memory_space<vmem>>, vector<4x1xf32>
    %c0_7 = arith.constant 0 : index
    %c0_8 = arith.constant 0 : index
    %8 = vector.load %arg10[%c0_7, %c0_8] : memref<4x1xf32, #tpu.memory_space<vmem>>, vector<4x1xf32>
    %c0_9 = arith.constant 0 : index
    %c0_10 = arith.constant 0 : index
    %9 = vector.load %arg5[%c0_9, %c0_10] : memref<12x4xf32, #tpu.memory_space<vmem>>, vector<12x4xf32>
    %c0_11 = arith.constant 0 : index
    %c0_12 = arith.constant 0 : index
    %10 = vector.load %arg6[%c0_11, %c0_12] : memref<12x9xf32, #tpu.memory_space<vmem>>, vector<12x9xf32>
    %c0_13 = arith.constant 0 : index
    %c0_14 = arith.constant 0 : index
    %11 = vector.load %arg7[%c0_13, %c0_14] : memref<2x1xf32, #tpu.memory_space<vmem>>, vector<2x1xf32>
    %c0_15 = arith.constant 0 : index
    %c0_16 = arith.constant 0 : index
    %12 = vector.load %arg8[%c0_15, %c0_16] : memref<4x4xf32, #tpu.memory_space<vmem>>, vector<4x4xf32>
    %c0_17 = arith.constant 0 : index
    %c0_18 = arith.constant 0 : index
    %13 = vector.load %arg11[%c0_17, %c0_18] : memref<16x4xf32, #tpu.memory_space<vmem>>, vector<16x4xf32>
    %c0_19 = arith.constant 0 : index
    %c0_20 = arith.constant 0 : index
    %14 = vector.load %arg12[%c0_19, %c0_20] : memref<16x9xf32, #tpu.memory_space<vmem>>, vector<16x9xf32>
    %c0_21 = arith.constant 0 : index
    %c0_22 = arith.constant 0 : index
    %15 = vector.load %arg13[%c0_21, %c0_22] : memref<4x8xf32, #tpu.memory_space<vmem>>, vector<4x8xf32>
    %c0_23 = arith.constant 0 : index
    %c0_24 = arith.constant 0 : index
    %c0_25 = arith.constant 0 : index
    %16 = vector.load %arg1[%c0_23, %c0_24, %c0_25] : memref<1x4x256xf32, #tpu.memory_space<vmem>>, vector<1x4x256xf32>
    %17 = vector.shape_cast %16 : vector<1x4x256xf32> to vector<4x256xf32>
    %cst = arith.constant dense<0.000000e+00> : vector<256xf32>
    %18 = vector.multi_reduction <add>, %17, %cst [0] : vector<4x256xf32> to vector<256xf32>
    %19 = vector.shape_cast %18 : vector<256xf32> to vector<1x256xf32>
    %cst_26 = arith.constant 4.000000e+00 : f32
    %20 = vector.broadcast %cst_26 : f32 to vector<1x256xf32>
    %21 = arith.divf %19, %20 : vector<1x256xf32>
    %22 = vector.broadcast %21 : vector<1x256xf32> to vector<4x256xf32>
    %23 = arith.subf %17, %22 : vector<4x256xf32>
    %24 = arith.mulf %23, %23 : vector<4x256xf32>
    %cst_27 = arith.constant dense<0.000000e+00> : vector<256xf32>
    %25 = vector.multi_reduction <add>, %24, %cst_27 [0] : vector<4x256xf32> to vector<256xf32>
    %26 = vector.shape_cast %25 : vector<256xf32> to vector<1x256xf32>
    %cst_28 = arith.constant 4.000000e+00 : f32
    %27 = vector.broadcast %cst_28 : f32 to vector<1x256xf32>
    %28 = arith.divf %26, %27 : vector<1x256xf32>
    %29 = vector.broadcast %21 : vector<1x256xf32> to vector<4x256xf32>
    %30 = arith.subf %17, %29 : vector<4x256xf32>
    %cst_29 = arith.constant 9.99999974E-6 : f32
    %31 = vector.broadcast %cst_29 : f32 to vector<1x256xf32>
    %32 = arith.addf %28, %31 : vector<1x256xf32>
    %33 = math.rsqrt %32 : vector<1x256xf32>
    %34 = vector.broadcast %33 : vector<1x256xf32> to vector<4x256xf32>
    %35 = arith.mulf %30, %34 : vector<4x256xf32>
    %36 = vector.broadcast %5 : vector<4x1xf32> to vector<4x256xf32>
    %37 = arith.mulf %35, %36 : vector<4x256xf32>
    %38 = vector.broadcast %6 : vector<4x1xf32> to vector<4x256xf32>
    %39 = arith.addf %37, %38 : vector<4x256xf32>
    %40 = vector.extract_strided_slice %9 {offsets = [0, 0], sizes = [12, 1], strides = [1, 1]} : vector<12x4xf32> to vector<12x1xf32>
    %41 = vector.extract_strided_slice %39 {offsets = [0, 0], sizes = [1, 256], strides = [1, 1]} : vector<4x256xf32> to vector<1x256xf32>
    %42 = vector.broadcast %40 : vector<12x1xf32> to vector<12x256xf32>
    %43 = vector.broadcast %41 : vector<1x256xf32> to vector<12x256xf32>
    %44 = arith.mulf %42, %43 : vector<12x256xf32>
    %45 = vector.extract_strided_slice %9 {offsets = [0, 1], sizes = [12, 1], strides = [1, 1]} : vector<12x4xf32> to vector<12x1xf32>
    %46 = vector.extract_strided_slice %39 {offsets = [1, 0], sizes = [1, 256], strides = [1, 1]} : vector<4x256xf32> to vector<1x256xf32>
    %47 = vector.broadcast %45 : vector<12x1xf32> to vector<12x256xf32>
    %48 = vector.broadcast %46 : vector<1x256xf32> to vector<12x256xf32>
    %49 = arith.mulf %47, %48 : vector<12x256xf32>
    %50 = arith.addf %44, %49 : vector<12x256xf32>
    %51 = vector.extract_strided_slice %9 {offsets = [0, 2], sizes = [12, 1], strides = [1, 1]} : vector<12x4xf32> to vector<12x1xf32>
    %52 = vector.extract_strided_slice %39 {offsets = [2, 0], sizes = [1, 256], strides = [1, 1]} : vector<4x256xf32> to vector<1x256xf32>
    %53 = vector.broadcast %51 : vector<12x1xf32> to vector<12x256xf32>
    %54 = vector.broadcast %52 : vector<1x256xf32> to vector<12x256xf32>
    %55 = arith.mulf %53, %54 : vector<12x256xf32>
    %56 = arith.addf %50, %55 : vector<12x256xf32>
    %57 = vector.extract_strided_slice %9 {offsets = [0, 3], sizes = [12, 1], strides = [1, 1]} : vector<12x4xf32> to vector<12x1xf32>
    %58 = vector.extract_strided_slice %39 {offsets = [3, 0], sizes = [1, 256], strides = [1, 1]} : vector<4x256xf32> to vector<1x256xf32>
    %59 = vector.broadcast %57 : vector<12x1xf32> to vector<12x256xf32>
    %60 = vector.broadcast %58 : vector<1x256xf32> to vector<12x256xf32>
    %61 = arith.mulf %59, %60 : vector<12x256xf32>
    %62 = arith.addf %56, %61 : vector<12x256xf32>
    %c16_i32 = arith.constant 16 : i32
    %63 = tpu.dynamic_rotate %62 by %c16_i32 dim 1 : vector<12x256xf32>, i32 -> vector<12x256xf32>
    %64 = vector.broadcast %1 : vector<1x256xf32> to vector<12x256xf32>
    %65 = arith.mulf %63, %64 : vector<12x256xf32>
    %c240_i32 = arith.constant 240 : i32
    %66 = tpu.dynamic_rotate %62 by %c240_i32 dim 1 : vector<12x256xf32>, i32 -> vector<12x256xf32>
    %67 = vector.broadcast %2 : vector<1x256xf32> to vector<12x256xf32>
    %68 = arith.mulf %66, %67 : vector<12x256xf32>
    %69 = vector.extract_strided_slice %10 {offsets = [0, 1], sizes = [12, 1], strides = [1, 1]} : vector<12x9xf32> to vector<12x1xf32>
    %70 = vector.broadcast %69 : vector<12x1xf32> to vector<12x256xf32>
    %71 = arith.mulf %65, %70 : vector<12x256xf32>
    %72 = vector.extract_strided_slice %10 {offsets = [0, 4], sizes = [12, 1], strides = [1, 1]} : vector<12x9xf32> to vector<12x1xf32>
    %73 = vector.broadcast %72 : vector<12x1xf32> to vector<12x256xf32>
    %74 = arith.mulf %62, %73 : vector<12x256xf32>
    %75 = arith.addf %71, %74 : vector<12x256xf32>
    %76 = vector.extract_strided_slice %10 {offsets = [0, 7], sizes = [12, 1], strides = [1, 1]} : vector<12x9xf32> to vector<12x1xf32>
    %77 = vector.broadcast %76 : vector<12x1xf32> to vector<12x256xf32>
    %78 = arith.mulf %68, %77 : vector<12x256xf32>
    %79 = arith.addf %75, %78 : vector<12x256xf32>
    %80 = vector.extract_strided_slice %10 {offsets = [0, 0], sizes = [12, 1], strides = [1, 1]} : vector<12x9xf32> to vector<12x1xf32>
    %81 = vector.broadcast %80 : vector<12x1xf32> to vector<12x256xf32>
    %82 = arith.mulf %65, %81 : vector<12x256xf32>
    %83 = vector.extract_strided_slice %10 {offsets = [0, 3], sizes = [12, 1], strides = [1, 1]} : vector<12x9xf32> to vector<12x1xf32>
    %84 = vector.broadcast %83 : vector<12x1xf32> to vector<12x256xf32>
    %85 = arith.mulf %62, %84 : vector<12x256xf32>
    %86 = arith.addf %82, %85 : vector<12x256xf32>
    %87 = vector.extract_strided_slice %10 {offsets = [0, 6], sizes = [12, 1], strides = [1, 1]} : vector<12x9xf32> to vector<12x1xf32>
    %88 = vector.broadcast %87 : vector<12x1xf32> to vector<12x256xf32>
    %89 = arith.mulf %68, %88 : vector<12x256xf32>
    %90 = arith.addf %86, %89 : vector<12x256xf32>
    %c1_i32 = arith.constant 1 : i32
    %91 = tpu.dynamic_rotate %90 by %c1_i32 dim 1 : vector<12x256xf32>, i32 -> vector<12x256xf32>
    %92 = vector.broadcast %3 : vector<1x256xf32> to vector<12x256xf32>
    %93 = arith.mulf %91, %92 : vector<12x256xf32>
    %94 = arith.addf %79, %93 : vector<12x256xf32>
    %95 = vector.extract_strided_slice %10 {offsets = [0, 2], sizes = [12, 1], strides = [1, 1]} : vector<12x9xf32> to vector<12x1xf32>
    %96 = vector.broadcast %95 : vector<12x1xf32> to vector<12x256xf32>
    %97 = arith.mulf %65, %96 : vector<12x256xf32>
    %98 = vector.extract_strided_slice %10 {offsets = [0, 5], sizes = [12, 1], strides = [1, 1]} : vector<12x9xf32> to vector<12x1xf32>
    %99 = vector.broadcast %98 : vector<12x1xf32> to vector<12x256xf32>
    %100 = arith.mulf %62, %99 : vector<12x256xf32>
    %101 = arith.addf %97, %100 : vector<12x256xf32>
    %102 = vector.extract_strided_slice %10 {offsets = [0, 8], sizes = [12, 1], strides = [1, 1]} : vector<12x9xf32> to vector<12x1xf32>
    %103 = vector.broadcast %102 : vector<12x1xf32> to vector<12x256xf32>
    %104 = arith.mulf %68, %103 : vector<12x256xf32>
    %105 = arith.addf %101, %104 : vector<12x256xf32>
    %c255_i32 = arith.constant 255 : i32
    %106 = tpu.dynamic_rotate %105 by %c255_i32 dim 1 : vector<12x256xf32>, i32 -> vector<12x256xf32>
    %107 = vector.broadcast %4 : vector<1x256xf32> to vector<12x256xf32>
    %108 = arith.mulf %106, %107 : vector<12x256xf32>
    %109 = arith.addf %94, %108 : vector<12x256xf32>
    %110 = vector.extract_strided_slice %109 {offsets = [0, 0], sizes = [4, 256], strides = [1, 1]} : vector<12x256xf32> to vector<4x256xf32>
    %111 = vector.extract_strided_slice %109 {offsets = [4, 0], sizes = [4, 256], strides = [1, 1]} : vector<12x256xf32> to vector<4x256xf32>
    %112 = vector.extract_strided_slice %109 {offsets = [8, 0], sizes = [4, 256], strides = [1, 1]} : vector<12x256xf32> to vector<4x256xf32>
    %113 = vector.extract_strided_slice %110 {offsets = [0, 0], sizes = [2, 256], strides = [1, 1]} : vector<4x256xf32> to vector<2x256xf32>
    %114 = arith.mulf %113, %113 : vector<2x256xf32>
    %cst_30 = arith.constant dense<0.000000e+00> : vector<2xf32>
    %115 = vector.multi_reduction <add>, %114, %cst_30 [1] : vector<2x256xf32> to vector<2xf32>
    %116 = vector.shape_cast %115 : vector<2xf32> to vector<2x1xf32>
    %cst_31 = arith.constant 1.000000e-24 : f32
    %117 = vector.broadcast %cst_31 : f32 to vector<2x1xf32>
    %118 = arith.maximumf %116, %117 : vector<2x1xf32>
    %119 = math.rsqrt %118 : vector<2x1xf32>
    %120 = vector.broadcast %119 : vector<2x1xf32> to vector<2x256xf32>
    %121 = arith.mulf %113, %120 : vector<2x256xf32>
    %122 = vector.extract_strided_slice %111 {offsets = [0, 0], sizes = [2, 256], strides = [1, 1]} : vector<4x256xf32> to vector<2x256xf32>
    %123 = arith.mulf %122, %122 : vector<2x256xf32>
    %cst_32 = arith.constant dense<0.000000e+00> : vector<2xf32>
    %124 = vector.multi_reduction <add>, %123, %cst_32 [1] : vector<2x256xf32> to vector<2xf32>
    %125 = vector.shape_cast %124 : vector<2xf32> to vector<2x1xf32>
    %cst_33 = arith.constant 1.000000e-24 : f32
    %126 = vector.broadcast %cst_33 : f32 to vector<2x1xf32>
    %127 = arith.maximumf %125, %126 : vector<2x1xf32>
    %128 = math.rsqrt %127 : vector<2x1xf32>
    %129 = vector.broadcast %128 : vector<2x1xf32> to vector<2x256xf32>
    %130 = arith.mulf %122, %129 : vector<2x256xf32>
    %cst_34 = arith.constant dense<0.000000e+00> : vector<2x2xf32>
    %131 = tpu.matmul %121, %130, %cst_34 {dimension_numbers = #tpu.dot_dimension_numbers<[1], [1], [0], [0], [0, 0, 1, 0], [], []>} : vector<2x256xf32>, vector<2x256xf32>, vector<2x2xf32> -> vector<2x2xf32>
    %132 = vector.extract_strided_slice %11 {offsets = [0, 0], sizes = [1, 1], strides = [1, 1]} : vector<2x1xf32> to vector<1x1xf32>
    %133 = vector.broadcast %132 : vector<1x1xf32> to vector<2x2xf32>
    %134 = arith.mulf %131, %133 : vector<2x2xf32>
    %cst_35 = arith.constant dense<0xFF800000> : vector<2xf32>
    %135 = vector.multi_reduction <maximumf>, %134, %cst_35 [1] : vector<2x2xf32> to vector<2xf32>
    %136 = vector.shape_cast %135 : vector<2xf32> to vector<2x1xf32>
    %137 = vector.broadcast %136 : vector<2x1xf32> to vector<2x2xf32>
    %138 = arith.subf %134, %137 : vector<2x2xf32>
    %139 = math.exp %138 : vector<2x2xf32>
    %cst_36 = arith.constant dense<0.000000e+00> : vector<2xf32>
    %140 = vector.multi_reduction <add>, %139, %cst_36 [1] : vector<2x2xf32> to vector<2xf32>
    %141 = vector.shape_cast %140 : vector<2xf32> to vector<2x1xf32>
    %142 = tpu.reciprocal %141 {approx = true} : vector<2x1xf32> -> vector<2x1xf32>
    %143 = vector.broadcast %142 : vector<2x1xf32> to vector<2x2xf32>
    %144 = arith.mulf %139, %143 : vector<2x2xf32>
    %145 = vector.extract_strided_slice %112 {offsets = [0, 0], sizes = [2, 256], strides = [1, 1]} : vector<4x256xf32> to vector<2x256xf32>
    %146 = vector.extract_strided_slice %144 {offsets = [0, 0], sizes = [2, 1], strides = [1, 1]} : vector<2x2xf32> to vector<2x1xf32>
    %147 = vector.extract_strided_slice %145 {offsets = [0, 0], sizes = [1, 256], strides = [1, 1]} : vector<2x256xf32> to vector<1x256xf32>
    %148 = vector.broadcast %146 : vector<2x1xf32> to vector<2x256xf32>
    %149 = vector.broadcast %147 : vector<1x256xf32> to vector<2x256xf32>
    %150 = arith.mulf %148, %149 : vector<2x256xf32>
    %151 = vector.extract_strided_slice %144 {offsets = [0, 1], sizes = [2, 1], strides = [1, 1]} : vector<2x2xf32> to vector<2x1xf32>
    %152 = vector.extract_strided_slice %145 {offsets = [1, 0], sizes = [1, 256], strides = [1, 1]} : vector<2x256xf32> to vector<1x256xf32>
    %153 = vector.broadcast %151 : vector<2x1xf32> to vector<2x256xf32>
    %154 = vector.broadcast %152 : vector<1x256xf32> to vector<2x256xf32>
    %155 = arith.mulf %153, %154 : vector<2x256xf32>
    %156 = arith.addf %150, %155 : vector<2x256xf32>
    %157 = vector.extract_strided_slice %110 {offsets = [2, 0], sizes = [2, 256], strides = [1, 1]} : vector<4x256xf32> to vector<2x256xf32>
    %158 = arith.mulf %157, %157 : vector<2x256xf32>
    %cst_37 = arith.constant dense<0.000000e+00> : vector<2xf32>
    %159 = vector.multi_reduction <add>, %158, %cst_37 [1] : vector<2x256xf32> to vector<2xf32>
    %160 = vector.shape_cast %159 : vector<2xf32> to vector<2x1xf32>
    %cst_38 = arith.constant 1.000000e-24 : f32
    %161 = vector.broadcast %cst_38 : f32 to vector<2x1xf32>
    %162 = arith.maximumf %160, %161 : vector<2x1xf32>
    %163 = math.rsqrt %162 : vector<2x1xf32>
    %164 = vector.broadcast %163 : vector<2x1xf32> to vector<2x256xf32>
    %165 = arith.mulf %157, %164 : vector<2x256xf32>
    %166 = vector.extract_strided_slice %111 {offsets = [2, 0], sizes = [2, 256], strides = [1, 1]} : vector<4x256xf32> to vector<2x256xf32>
    %167 = arith.mulf %166, %166 : vector<2x256xf32>
    %cst_39 = arith.constant dense<0.000000e+00> : vector<2xf32>
    %168 = vector.multi_reduction <add>, %167, %cst_39 [1] : vector<2x256xf32> to vector<2xf32>
    %169 = vector.shape_cast %168 : vector<2xf32> to vector<2x1xf32>
    %cst_40 = arith.constant 1.000000e-24 : f32
    %170 = vector.broadcast %cst_40 : f32 to vector<2x1xf32>
    %171 = arith.maximumf %169, %170 : vector<2x1xf32>
    %172 = math.rsqrt %171 : vector<2x1xf32>
    %173 = vector.broadcast %172 : vector<2x1xf32> to vector<2x256xf32>
    %174 = arith.mulf %166, %173 : vector<2x256xf32>
    %cst_41 = arith.constant dense<0.000000e+00> : vector<2x2xf32>
    %175 = tpu.matmul %165, %174, %cst_41 {dimension_numbers = #tpu.dot_dimension_numbers<[1], [1], [0], [0], [0, 0, 1, 0], [], []>} : vector<2x256xf32>, vector<2x256xf32>, vector<2x2xf32> -> vector<2x2xf32>
    %176 = vector.extract_strided_slice %11 {offsets = [1, 0], sizes = [1, 1], strides = [1, 1]} : vector<2x1xf32> to vector<1x1xf32>
    %177 = vector.broadcast %176 : vector<1x1xf32> to vector<2x2xf32>
    %178 = arith.mulf %175, %177 : vector<2x2xf32>
    %cst_42 = arith.constant dense<0xFF800000> : vector<2xf32>
    %179 = vector.multi_reduction <maximumf>, %178, %cst_42 [1] : vector<2x2xf32> to vector<2xf32>
    %180 = vector.shape_cast %179 : vector<2xf32> to vector<2x1xf32>
    %181 = vector.broadcast %180 : vector<2x1xf32> to vector<2x2xf32>
    %182 = arith.subf %178, %181 : vector<2x2xf32>
    %183 = math.exp %182 : vector<2x2xf32>
    %cst_43 = arith.constant dense<0.000000e+00> : vector<2xf32>
    %184 = vector.multi_reduction <add>, %183, %cst_43 [1] : vector<2x2xf32> to vector<2xf32>
    %185 = vector.shape_cast %184 : vector<2xf32> to vector<2x1xf32>
    %186 = tpu.reciprocal %185 {approx = true} : vector<2x1xf32> -> vector<2x1xf32>
    %187 = vector.broadcast %186 : vector<2x1xf32> to vector<2x2xf32>
    %188 = arith.mulf %183, %187 : vector<2x2xf32>
    %189 = vector.extract_strided_slice %112 {offsets = [2, 0], sizes = [2, 256], strides = [1, 1]} : vector<4x256xf32> to vector<2x256xf32>
    %190 = vector.extract_strided_slice %188 {offsets = [0, 0], sizes = [2, 1], strides = [1, 1]} : vector<2x2xf32> to vector<2x1xf32>
    %191 = vector.extract_strided_slice %189 {offsets = [0, 0], sizes = [1, 256], strides = [1, 1]} : vector<2x256xf32> to vector<1x256xf32>
    %192 = vector.broadcast %190 : vector<2x1xf32> to vector<2x256xf32>
    %193 = vector.broadcast %191 : vector<1x256xf32> to vector<2x256xf32>
    %194 = arith.mulf %192, %193 : vector<2x256xf32>
    %195 = vector.extract_strided_slice %188 {offsets = [0, 1], sizes = [2, 1], strides = [1, 1]} : vector<2x2xf32> to vector<2x1xf32>
    %196 = vector.extract_strided_slice %189 {offsets = [1, 0], sizes = [1, 256], strides = [1, 1]} : vector<2x256xf32> to vector<1x256xf32>
    %197 = vector.broadcast %195 : vector<2x1xf32> to vector<2x256xf32>
    %198 = vector.broadcast %196 : vector<1x256xf32> to vector<2x256xf32>
    %199 = arith.mulf %197, %198 : vector<2x256xf32>
    %200 = arith.addf %194, %199 : vector<2x256xf32>
    %201 = tpu.concatenate %156, %200 in 0 : vector<2x256xf32>, vector<2x256xf32> -> vector<4x256xf32>
    %202 = vector.extract_strided_slice %12 {offsets = [0, 0], sizes = [4, 1], strides = [1, 1]} : vector<4x4xf32> to vector<4x1xf32>
    %203 = vector.extract_strided_slice %201 {offsets = [0, 0], sizes = [1, 256], strides = [1, 1]} : vector<4x256xf32> to vector<1x256xf32>
    %204 = vector.broadcast %202 : vector<4x1xf32> to vector<4x256xf32>
    %205 = vector.broadcast %203 : vector<1x256xf32> to vector<4x256xf32>
    %206 = arith.mulf %204, %205 : vector<4x256xf32>
    %207 = vector.extract_strided_slice %12 {offsets = [0, 1], sizes = [4, 1], strides = [1, 1]} : vector<4x4xf32> to vector<4x1xf32>
    %208 = vector.extract_strided_slice %201 {offsets = [1, 0], sizes = [1, 256], strides = [1, 1]} : vector<4x256xf32> to vector<1x256xf32>
    %209 = vector.broadcast %207 : vector<4x1xf32> to vector<4x256xf32>
    %210 = vector.broadcast %208 : vector<1x256xf32> to vector<4x256xf32>
    %211 = arith.mulf %209, %210 : vector<4x256xf32>
    %212 = arith.addf %206, %211 : vector<4x256xf32>
    %213 = vector.extract_strided_slice %12 {offsets = [0, 2], sizes = [4, 1], strides = [1, 1]} : vector<4x4xf32> to vector<4x1xf32>
    %214 = vector.extract_strided_slice %201 {offsets = [2, 0], sizes = [1, 256], strides = [1, 1]} : vector<4x256xf32> to vector<1x256xf32>
    %215 = vector.broadcast %213 : vector<4x1xf32> to vector<4x256xf32>
    %216 = vector.broadcast %214 : vector<1x256xf32> to vector<4x256xf32>
    %217 = arith.mulf %215, %216 : vector<4x256xf32>
    %218 = arith.addf %212, %217 : vector<4x256xf32>
    %219 = vector.extract_strided_slice %12 {offsets = [0, 3], sizes = [4, 1], strides = [1, 1]} : vector<4x4xf32> to vector<4x1xf32>
    %220 = vector.extract_strided_slice %201 {offsets = [3, 0], sizes = [1, 256], strides = [1, 1]} : vector<4x256xf32> to vector<1x256xf32>
    %221 = vector.broadcast %219 : vector<4x1xf32> to vector<4x256xf32>
    %222 = vector.broadcast %220 : vector<1x256xf32> to vector<4x256xf32>
    %223 = arith.mulf %221, %222 : vector<4x256xf32>
    %224 = arith.addf %218, %223 : vector<4x256xf32>
    %225 = arith.addf %17, %224 : vector<4x256xf32>
    %cst_44 = arith.constant dense<0.000000e+00> : vector<256xf32>
    %226 = vector.multi_reduction <add>, %225, %cst_44 [0] : vector<4x256xf32> to vector<256xf32>
    %227 = vector.shape_cast %226 : vector<256xf32> to vector<1x256xf32>
    %cst_45 = arith.constant 4.000000e+00 : f32
    %228 = vector.broadcast %cst_45 : f32 to vector<1x256xf32>
    %229 = arith.divf %227, %228 : vector<1x256xf32>
    %230 = vector.broadcast %229 : vector<1x256xf32> to vector<4x256xf32>
    %231 = arith.subf %225, %230 : vector<4x256xf32>
    %232 = arith.mulf %231, %231 : vector<4x256xf32>
    %cst_46 = arith.constant dense<0.000000e+00> : vector<256xf32>
    %233 = vector.multi_reduction <add>, %232, %cst_46 [0] : vector<4x256xf32> to vector<256xf32>
    %234 = vector.shape_cast %233 : vector<256xf32> to vector<1x256xf32>
    %cst_47 = arith.constant 4.000000e+00 : f32
    %235 = vector.broadcast %cst_47 : f32 to vector<1x256xf32>
    %236 = arith.divf %234, %235 : vector<1x256xf32>
    %237 = vector.broadcast %229 : vector<1x256xf32> to vector<4x256xf32>
    %238 = arith.subf %225, %237 : vector<4x256xf32>
    %cst_48 = arith.constant 9.99999974E-6 : f32
    %239 = vector.broadcast %cst_48 : f32 to vector<1x256xf32>
    %240 = arith.addf %236, %239 : vector<1x256xf32>
    %241 = math.rsqrt %240 : vector<1x256xf32>
    %242 = vector.broadcast %241 : vector<1x256xf32> to vector<4x256xf32>
    %243 = arith.mulf %238, %242 : vector<4x256xf32>
    %244 = vector.broadcast %7 : vector<4x1xf32> to vector<4x256xf32>
    %245 = arith.mulf %243, %244 : vector<4x256xf32>
    %246 = vector.broadcast %8 : vector<4x1xf32> to vector<4x256xf32>
    %247 = arith.addf %245, %246 : vector<4x256xf32>
    %248 = vector.extract_strided_slice %13 {offsets = [0, 0], sizes = [16, 1], strides = [1, 1]} : vector<16x4xf32> to vector<16x1xf32>
    %249 = vector.extract_strided_slice %247 {offsets = [0, 0], sizes = [1, 256], strides = [1, 1]} : vector<4x256xf32> to vector<1x256xf32>
    %250 = vector.broadcast %248 : vector<16x1xf32> to vector<16x256xf32>
    %251 = vector.broadcast %249 : vector<1x256xf32> to vector<16x256xf32>
    %252 = arith.mulf %250, %251 : vector<16x256xf32>
    %253 = vector.extract_strided_slice %13 {offsets = [0, 1], sizes = [16, 1], strides = [1, 1]} : vector<16x4xf32> to vector<16x1xf32>
    %254 = vector.extract_strided_slice %247 {offsets = [1, 0], sizes = [1, 256], strides = [1, 1]} : vector<4x256xf32> to vector<1x256xf32>
    %255 = vector.broadcast %253 : vector<16x1xf32> to vector<16x256xf32>
    %256 = vector.broadcast %254 : vector<1x256xf32> to vector<16x256xf32>
    %257 = arith.mulf %255, %256 : vector<16x256xf32>
    %258 = arith.addf %252, %257 : vector<16x256xf32>
    %259 = vector.extract_strided_slice %13 {offsets = [0, 2], sizes = [16, 1], strides = [1, 1]} : vector<16x4xf32> to vector<16x1xf32>
    %260 = vector.extract_strided_slice %247 {offsets = [2, 0], sizes = [1, 256], strides = [1, 1]} : vector<4x256xf32> to vector<1x256xf32>
    %261 = vector.broadcast %259 : vector<16x1xf32> to vector<16x256xf32>
    %262 = vector.broadcast %260 : vector<1x256xf32> to vector<16x256xf32>
    %263 = arith.mulf %261, %262 : vector<16x256xf32>
    %264 = arith.addf %258, %263 : vector<16x256xf32>
    %265 = vector.extract_strided_slice %13 {offsets = [0, 3], sizes = [16, 1], strides = [1, 1]} : vector<16x4xf32> to vector<16x1xf32>
    %266 = vector.extract_strided_slice %247 {offsets = [3, 0], sizes = [1, 256], strides = [1, 1]} : vector<4x256xf32> to vector<1x256xf32>
    %267 = vector.broadcast %265 : vector<16x1xf32> to vector<16x256xf32>
    %268 = vector.broadcast %266 : vector<1x256xf32> to vector<16x256xf32>
    %269 = arith.mulf %267, %268 : vector<16x256xf32>
    %270 = arith.addf %264, %269 : vector<16x256xf32>
    %c16_i32_49 = arith.constant 16 : i32
    %271 = tpu.dynamic_rotate %270 by %c16_i32_49 dim 1 : vector<16x256xf32>, i32 -> vector<16x256xf32>
    %272 = vector.broadcast %1 : vector<1x256xf32> to vector<16x256xf32>
    %273 = arith.mulf %271, %272 : vector<16x256xf32>
    %c240_i32_50 = arith.constant 240 : i32
    %274 = tpu.dynamic_rotate %270 by %c240_i32_50 dim 1 : vector<16x256xf32>, i32 -> vector<16x256xf32>
    %275 = vector.broadcast %2 : vector<1x256xf32> to vector<16x256xf32>
    %276 = arith.mulf %274, %275 : vector<16x256xf32>
    %277 = vector.extract_strided_slice %14 {offsets = [0, 1], sizes = [16, 1], strides = [1, 1]} : vector<16x9xf32> to vector<16x1xf32>
    %278 = vector.broadcast %277 : vector<16x1xf32> to vector<16x256xf32>
    %279 = arith.mulf %273, %278 : vector<16x256xf32>
    %280 = vector.extract_strided_slice %14 {offsets = [0, 4], sizes = [16, 1], strides = [1, 1]} : vector<16x9xf32> to vector<16x1xf32>
    %281 = vector.broadcast %280 : vector<16x1xf32> to vector<16x256xf32>
    %282 = arith.mulf %270, %281 : vector<16x256xf32>
    %283 = arith.addf %279, %282 : vector<16x256xf32>
    %284 = vector.extract_strided_slice %14 {offsets = [0, 7], sizes = [16, 1], strides = [1, 1]} : vector<16x9xf32> to vector<16x1xf32>
    %285 = vector.broadcast %284 : vector<16x1xf32> to vector<16x256xf32>
    %286 = arith.mulf %276, %285 : vector<16x256xf32>
    %287 = arith.addf %283, %286 : vector<16x256xf32>
    %288 = vector.extract_strided_slice %14 {offsets = [0, 0], sizes = [16, 1], strides = [1, 1]} : vector<16x9xf32> to vector<16x1xf32>
    %289 = vector.broadcast %288 : vector<16x1xf32> to vector<16x256xf32>
    %290 = arith.mulf %273, %289 : vector<16x256xf32>
    %291 = vector.extract_strided_slice %14 {offsets = [0, 3], sizes = [16, 1], strides = [1, 1]} : vector<16x9xf32> to vector<16x1xf32>
    %292 = vector.broadcast %291 : vector<16x1xf32> to vector<16x256xf32>
    %293 = arith.mulf %270, %292 : vector<16x256xf32>
    %294 = arith.addf %290, %293 : vector<16x256xf32>
    %295 = vector.extract_strided_slice %14 {offsets = [0, 6], sizes = [16, 1], strides = [1, 1]} : vector<16x9xf32> to vector<16x1xf32>
    %296 = vector.broadcast %295 : vector<16x1xf32> to vector<16x256xf32>
    %297 = arith.mulf %276, %296 : vector<16x256xf32>
    %298 = arith.addf %294, %297 : vector<16x256xf32>
    %c1_i32_51 = arith.constant 1 : i32
    %299 = tpu.dynamic_rotate %298 by %c1_i32_51 dim 1 : vector<16x256xf32>, i32 -> vector<16x256xf32>
    %300 = vector.broadcast %3 : vector<1x256xf32> to vector<16x256xf32>
    %301 = arith.mulf %299, %300 : vector<16x256xf32>
    %302 = arith.addf %287, %301 : vector<16x256xf32>
    %303 = vector.extract_strided_slice %14 {offsets = [0, 2], sizes = [16, 1], strides = [1, 1]} : vector<16x9xf32> to vector<16x1xf32>
    %304 = vector.broadcast %303 : vector<16x1xf32> to vector<16x256xf32>
    %305 = arith.mulf %273, %304 : vector<16x256xf32>
    %306 = vector.extract_strided_slice %14 {offsets = [0, 5], sizes = [16, 1], strides = [1, 1]} : vector<16x9xf32> to vector<16x1xf32>
    %307 = vector.broadcast %306 : vector<16x1xf32> to vector<16x256xf32>
    %308 = arith.mulf %270, %307 : vector<16x256xf32>
    %309 = arith.addf %305, %308 : vector<16x256xf32>
    %310 = vector.extract_strided_slice %14 {offsets = [0, 8], sizes = [16, 1], strides = [1, 1]} : vector<16x9xf32> to vector<16x1xf32>
    %311 = vector.broadcast %310 : vector<16x1xf32> to vector<16x256xf32>
    %312 = arith.mulf %276, %311 : vector<16x256xf32>
    %313 = arith.addf %309, %312 : vector<16x256xf32>
    %c255_i32_52 = arith.constant 255 : i32
    %314 = tpu.dynamic_rotate %313 by %c255_i32_52 dim 1 : vector<16x256xf32>, i32 -> vector<16x256xf32>
    %315 = vector.broadcast %4 : vector<1x256xf32> to vector<16x256xf32>
    %316 = arith.mulf %314, %315 : vector<16x256xf32>
    %317 = arith.addf %302, %316 : vector<16x256xf32>
    %318 = vector.extract_strided_slice %317 {offsets = [0, 0], sizes = [8, 256], strides = [1, 1]} : vector<16x256xf32> to vector<8x256xf32>
    %319 = vector.extract_strided_slice %317 {offsets = [8, 0], sizes = [8, 256], strides = [1, 1]} : vector<16x256xf32> to vector<8x256xf32>
    %cst_53 = arith.constant 5.000000e-01 : f32
    %320 = vector.broadcast %cst_53 : f32 to vector<8x256xf32>
    %321 = arith.mulf %320, %318 : vector<8x256xf32>
    %cst_54 = arith.constant 0.707106769 : f32
    %322 = vector.broadcast %cst_54 : f32 to vector<8x256xf32>
    %323 = arith.mulf %318, %322 : vector<8x256xf32>
    %324 = math.erf %323 : vector<8x256xf32>
    %cst_55 = arith.constant 1.000000e+00 : f32
    %325 = vector.broadcast %cst_55 : f32 to vector<8x256xf32>
    %326 = arith.addf %325, %324 : vector<8x256xf32>
    %327 = arith.mulf %321, %326 : vector<8x256xf32>
    %328 = arith.mulf %327, %319 : vector<8x256xf32>
    %329 = vector.extract_strided_slice %15 {offsets = [0, 0], sizes = [4, 1], strides = [1, 1]} : vector<4x8xf32> to vector<4x1xf32>
    %330 = vector.extract_strided_slice %328 {offsets = [0, 0], sizes = [1, 256], strides = [1, 1]} : vector<8x256xf32> to vector<1x256xf32>
    %331 = vector.broadcast %329 : vector<4x1xf32> to vector<4x256xf32>
    %332 = vector.broadcast %330 : vector<1x256xf32> to vector<4x256xf32>
    %333 = arith.mulf %331, %332 : vector<4x256xf32>
    %334 = vector.extract_strided_slice %15 {offsets = [0, 1], sizes = [4, 1], strides = [1, 1]} : vector<4x8xf32> to vector<4x1xf32>
    %335 = vector.extract_strided_slice %328 {offsets = [1, 0], sizes = [1, 256], strides = [1, 1]} : vector<8x256xf32> to vector<1x256xf32>
    %336 = vector.broadcast %334 : vector<4x1xf32> to vector<4x256xf32>
    %337 = vector.broadcast %335 : vector<1x256xf32> to vector<4x256xf32>
    %338 = arith.mulf %336, %337 : vector<4x256xf32>
    %339 = arith.addf %333, %338 : vector<4x256xf32>
    %340 = vector.extract_strided_slice %15 {offsets = [0, 2], sizes = [4, 1], strides = [1, 1]} : vector<4x8xf32> to vector<4x1xf32>
    %341 = vector.extract_strided_slice %328 {offsets = [2, 0], sizes = [1, 256], strides = [1, 1]} : vector<8x256xf32> to vector<1x256xf32>
    %342 = vector.broadcast %340 : vector<4x1xf32> to vector<4x256xf32>
    %343 = vector.broadcast %341 : vector<1x256xf32> to vector<4x256xf32>
    %344 = arith.mulf %342, %343 : vector<4x256xf32>
    %345 = arith.addf %339, %344 : vector<4x256xf32>
    %346 = vector.extract_strided_slice %15 {offsets = [0, 3], sizes = [4, 1], strides = [1, 1]} : vector<4x8xf32> to vector<4x1xf32>
    %347 = vector.extract_strided_slice %328 {offsets = [3, 0], sizes = [1, 256], strides = [1, 1]} : vector<8x256xf32> to vector<1x256xf32>
    %348 = vector.broadcast %346 : vector<4x1xf32> to vector<4x256xf32>
    %349 = vector.broadcast %347 : vector<1x256xf32> to vector<4x256xf32>
    %350 = arith.mulf %348, %349 : vector<4x256xf32>
    %351 = arith.addf %345, %350 : vector<4x256xf32>
    %352 = vector.extract_strided_slice %15 {offsets = [0, 4], sizes = [4, 1], strides = [1, 1]} : vector<4x8xf32> to vector<4x1xf32>
    %353 = vector.extract_strided_slice %328 {offsets = [4, 0], sizes = [1, 256], strides = [1, 1]} : vector<8x256xf32> to vector<1x256xf32>
    %354 = vector.broadcast %352 : vector<4x1xf32> to vector<4x256xf32>
    %355 = vector.broadcast %353 : vector<1x256xf32> to vector<4x256xf32>
    %356 = arith.mulf %354, %355 : vector<4x256xf32>
    %357 = arith.addf %351, %356 : vector<4x256xf32>
    %358 = vector.extract_strided_slice %15 {offsets = [0, 5], sizes = [4, 1], strides = [1, 1]} : vector<4x8xf32> to vector<4x1xf32>
    %359 = vector.extract_strided_slice %328 {offsets = [5, 0], sizes = [1, 256], strides = [1, 1]} : vector<8x256xf32> to vector<1x256xf32>
    %360 = vector.broadcast %358 : vector<4x1xf32> to vector<4x256xf32>
    %361 = vector.broadcast %359 : vector<1x256xf32> to vector<4x256xf32>
    %362 = arith.mulf %360, %361 : vector<4x256xf32>
    %363 = arith.addf %357, %362 : vector<4x256xf32>
    %364 = vector.extract_strided_slice %15 {offsets = [0, 6], sizes = [4, 1], strides = [1, 1]} : vector<4x8xf32> to vector<4x1xf32>
    %365 = vector.extract_strided_slice %328 {offsets = [6, 0], sizes = [1, 256], strides = [1, 1]} : vector<8x256xf32> to vector<1x256xf32>
    %366 = vector.broadcast %364 : vector<4x1xf32> to vector<4x256xf32>
    %367 = vector.broadcast %365 : vector<1x256xf32> to vector<4x256xf32>
    %368 = arith.mulf %366, %367 : vector<4x256xf32>
    %369 = arith.addf %363, %368 : vector<4x256xf32>
    %370 = vector.extract_strided_slice %15 {offsets = [0, 7], sizes = [4, 1], strides = [1, 1]} : vector<4x8xf32> to vector<4x1xf32>
    %371 = vector.extract_strided_slice %328 {offsets = [7, 0], sizes = [1, 256], strides = [1, 1]} : vector<8x256xf32> to vector<1x256xf32>
    %372 = vector.broadcast %370 : vector<4x1xf32> to vector<4x256xf32>
    %373 = vector.broadcast %371 : vector<1x256xf32> to vector<4x256xf32>
    %374 = arith.mulf %372, %373 : vector<4x256xf32>
    %375 = arith.addf %369, %374 : vector<4x256xf32>
    %376 = arith.addf %225, %375 : vector<4x256xf32>
    %c0_56 = arith.constant 0 : index
    %c0_57 = arith.constant 0 : index
    %c0_58 = arith.constant 0 : index
    %377 = vector.load %arg14[%c0_56, %c0_57, %c0_58] : memref<1x4x256xf32, #tpu.memory_space<vmem>>, vector<1x4x256xf32>
    %378 = vector.shape_cast %377 : vector<1x4x256xf32> to vector<4x256xf32>
    %379 = vector.shape_cast %376 : vector<4x256xf32> to vector<1x4x256xf32>
    tpu.vector_store %arg14[%c0_56, %c0_57, %c0_58], %379 {strides = array<i32>} : memref<1x4x256xf32, #tpu.memory_space<vmem>>, vector<1x4x256xf32>,
    return
  }
  func.func @transform_0(%arg0: i32) -> (i32, i32, i32) {
    %c0_i32 = arith.constant 0 : i32
    %c0_i32_0 = arith.constant 0 : i32
    %c0_i32_1 = arith.constant 0 : i32
    return %arg0, %c0_i32, %c0_i32_0 : i32, i32, i32
  }
  func.func @transform_1(%arg0: i32) -> (i32, i32) {
    %c0_i32 = arith.constant 0 : i32
    %c0_i32_0 = arith.constant 0 : i32
    %c0_i32_1 = arith.constant 0 : i32
    return %c0_i32, %c0_i32_0 : i32, i32
  }
  func.func @transform_2(%arg0: i32) -> (i32, i32) {
    %c0_i32 = arith.constant 0 : i32
    %c0_i32_0 = arith.constant 0 : i32
    %c0_i32_1 = arith.constant 0 : i32
    return %c0_i32, %c0_i32_0 : i32, i32
  }
  func.func @transform_3(%arg0: i32) -> (i32, i32) {
    %c0_i32 = arith.constant 0 : i32
    %c0_i32_0 = arith.constant 0 : i32
    %c0_i32_1 = arith.constant 0 : i32
    return %c0_i32, %c0_i32_0 : i32, i32
  }
  func.func @transform_4(%arg0: i32) -> (i32, i32) {
    %c0_i32 = arith.constant 0 : i32
    %c0_i32_0 = arith.constant 0 : i32
    %c0_i32_1 = arith.constant 0 : i32
    return %c0_i32, %c0_i32_0 : i32, i32
  }
  func.func @transform_5(%arg0: i32) -> (i32, i32) {
    %c0_i32 = arith.constant 0 : i32
    %c0_i32_0 = arith.constant 0 : i32
    %c0_i32_1 = arith.constant 0 : i32
    return %c0_i32, %c0_i32_0 : i32, i32
  }
  func.func @transform_6(%arg0: i32) -> (i32, i32) {
    %c0_i32 = arith.constant 0 : i32
    %c0_i32_0 = arith.constant 0 : i32
    %c0_i32_1 = arith.constant 0 : i32
    return %c0_i32, %c0_i32_0 : i32, i32
  }
  func.func @transform_7(%arg0: i32) -> (i32, i32) {
    %c0_i32 = arith.constant 0 : i32
    %c0_i32_0 = arith.constant 0 : i32
    %c0_i32_1 = arith.constant 0 : i32
    return %c0_i32, %c0_i32_0 : i32, i32
  }
  func.func @transform_8(%arg0: i32) -> (i32, i32) {
    %c0_i32 = arith.constant 0 : i32
    %c0_i32_0 = arith.constant 0 : i32
    %c0_i32_1 = arith.constant 0 : i32
    return %c0_i32, %c0_i32_0 : i32, i32
  }
  func.func @transform_9(%arg0: i32) -> (i32, i32) {
    %c0_i32 = arith.constant 0 : i32
    %c0_i32_0 = arith.constant 0 : i32
    %c0_i32_1 = arith.constant 0 : i32
    return %c0_i32, %c0_i32_0 : i32, i32
  }
  func.func @transform_10(%arg0: i32) -> (i32, i32) {
    %c0_i32 = arith.constant 0 : i32
    %c0_i32_0 = arith.constant 0 : i32
    %c0_i32_1 = arith.constant 0 : i32
    return %c0_i32, %c0_i32_0 : i32, i32
  }
  func.func @transform_11(%arg0: i32) -> (i32, i32) {
    %c0_i32 = arith.constant 0 : i32
    %c0_i32_0 = arith.constant 0 : i32
    %c0_i32_1 = arith.constant 0 : i32
    return %c0_i32, %c0_i32_0 : i32, i32
  }
  func.func @transform_12(%arg0: i32) -> (i32, i32) {
    %c0_i32 = arith.constant 0 : i32
    %c0_i32_0 = arith.constant 0 : i32
    %c0_i32_1 = arith.constant 0 : i32
    return %c0_i32, %c0_i32_0 : i32, i32
  }
  func.func @transform_13(%arg0: i32) -> (i32, i32, i32) {
    %c0_i32 = arith.constant 0 : i32
    %c0_i32_0 = arith.constant 0 : i32
    %c0_i32_1 = arith.constant 0 : i32
    return %arg0, %c0_i32, %c0_i32_0 : i32, i32, i32
  }
}

</mosaic_0001>

<llo_original>
// kernel: tpu_custom_call.1
$region0: #{tpu_custom_call.1}
  #allocation0 [shape = 'u32[]', space=smem, size = 0x4, offset = 0x4, fixed_abs, tag = 'smem constant byte address 0x4 - core index']
  #allocation1 [shape = 'u32[144,128]{1,0:T(1,128)}', space=vmem, size = 0x12000, scoped, tag = 'internal scratch']
  %s0 = inlined_call_operand.vmem [shape: f32[2,4,256], index: 0, kind: input, shape index: {}]
  %s1 = inlined_call_operand.vmem [shape: f32[4,256], index: 1, kind: input, shape index: {}]
  %s2 = inlined_call_operand.vmem [shape: f32[4,1], index: 2, kind: input, shape index: {}]
  %s3 = inlined_call_operand.vmem [shape: f32[4,1], index: 3, kind: input, shape index: {}]
  %s4 = inlined_call_operand.vmem [shape: f32[12,4], index: 4, kind: input, shape index: {}]
  %s5 = inlined_call_operand.vmem [shape: f32[12,9], index: 5, kind: input, shape index: {}]
  %s6 = inlined_call_operand.vmem [shape: f32[2,1], index: 6, kind: input, shape index: {}]
  %s7 = inlined_call_operand.vmem [shape: f32[4,4], index: 7, kind: input, shape index: {}]
  %s8 = inlined_call_operand.vmem [shape: f32[4,1], index: 8, kind: input, shape index: {}]
  %s9 = inlined_call_operand.vmem [shape: f32[4,1], index: 9, kind: input, shape index: {}]
  %s10 = inlined_call_operand.vmem [shape: f32[16,4], index: 10, kind: input, shape index: {}]
  %s11 = inlined_call_operand.vmem [shape: f32[16,9], index: 11, kind: input, shape index: {}]
  %s12 = inlined_call_operand.vmem [shape: f32[4,8], index: 12, kind: input, shape index: {}]
  %s13 = inlined_call_operand.hbm [shape: f32[2,4,256], index: 13, kind: output, shape index: {}]
  %s14 = sld [smem:[#allocation0]]
  $region85: #{tpu_custom_call.1} parent=0
    _
  %s16 = ssub.s32 1, %s14
  %s17 = scalar_select 0, %s16, %s14
  $region1: #{tpu_custom_call.1} parent=0
    #allocation2 [shape = 'u8[8192]{0}', space=vmem, size = 0x2000, scoped, tag = 'output window, operand 0']
    #allocation3 [shape = 's32[2]{0}', space=sflag, size = 0x8, scoped, tag = 'scoped memory for tpu_custom_call.1']
    %18 = vsyncpa [#allocation3], 0
    %s19 = scalar_lea.sflag [#allocation3], 1
    %20 = vsyncpa %s19, 0
    loop: start=0, step=1, limit=4
    $region2: #{tpu_custom_call.1} parent=1 // loop_pre_header
      _
    $region3: #{tpu_custom_call.1} parent=1 // loop_header
      %s22 = sphi 0, %s26
      %p23 = scmp.ge.s32.totalorder %s22, 4
      %s32 = sphi 0, %s34
      %s35 = sphi 0, %s32
      %s36 = sphi 0, %s35
      %s52 = sphi 0, %s36
      %s56 = sphi 0, %s56
      %s58 = sphi 0, %s56
      %s59 = sphi 0, %s58
      %s73 = sphi 0, %s59
      %s77 = sphi 0, %s77
      %s79 = sphi 0, %s77
      %s80 = sphi 0, %s79
      %s94 = sphi 0, %s80
      %s98 = sphi 0, %s98
      %s100 = sphi 0, %s98
      %s101 = sphi 0, %s100
      %s115 = sphi 0, %s101
      %s119 = sphi 0, %s119
      %s121 = sphi 0, %s119
      %s122 = sphi 0, %s121
      %s136 = sphi 0, %s122
      %s140 = sphi 0, %s140
      %s142 = sphi 0, %s140
      %s143 = sphi 0, %s142
      %s157 = sphi 0, %s143
      %s161 = sphi 0, %s161
      %s163 = sphi 0, %s161
      %s164 = sphi 0, %s163
      %s178 = sphi 0, %s164
      %s182 = sphi 0, %s182
      %s184 = sphi 0, %s182
      %s185 = sphi 0, %s184
      %s199 = sphi 0, %s185
      %s203 = sphi 0, %s203
      %s205 = sphi 0, %s203
      %s206 = sphi 0, %s205
      %s220 = sphi 0, %s206
      %s224 = sphi 0, %s224
      %s226 = sphi 0, %s224
      %s227 = sphi 0, %s226
      %s241 = sphi 0, %s227
      %s245 = sphi 0, %s245
      %s247 = sphi 0, %s245
      %s248 = sphi 0, %s247
      %s262 = sphi 0, %s248
      %s266 = sphi 0, %s266
      %s268 = sphi 0, %s266
      %s269 = sphi 0, %s268
      %s283 = sphi 0, %s269
      %s287 = sphi 0, %s287
      %s289 = sphi 0, %s287
      %s290 = sphi 0, %s289
      %s304 = sphi 0, %s290
      %s310 = sphi 0, %s312
      %s313 = sphi 0, %s310
      %s314 = sphi 0, %s313
      %s330 = sphi 0, %s314
    $region4: #{tpu_custom_call.1} parent=1 // loop_header_branch
      %25 = sbr.rel (%p23) target = $region8
    $region5: #{tpu_custom_call.1} parent=1 // loop_body
      %s27 = ssub.s32 %s22, 1
      %s28 = ssub.s32 %s22, 2
      %s29 = sadd.s32 %s22, 1
      %s30 = ssub.s32 %s22, %s29
      %p31 = scmp.eq.s32.totalorder %s30, 0
      %s33 = sadd.s32 %s32, 1
      %s34 = scalar_select %p31, %s32, %s33
      %p37 = pneg %p31
      %p38 = scmp.eq.s32.totalorder %s22, 1
      %p39 = por %p37, %p38
      %p40 = scmp.ne.s32.totalorder %s32, %s35
      %p41 = scmp.eq.s32.totalorder %s22, 0
      %p42 = por %p40, %p41
      %p43 = scmp.ne.s32.totalorder %s32, %s35
      %p44 = scmp.eq.s32.totalorder %s27, 1
      %p45 = por %p43, %p44
      %p46 = scmp.ne.s32.totalorder %s35, %s36
      %p47 = scmp.eq.s32.totalorder %s27, 0
      %p48 = por %p46, %p47
      %p49 = scmp.ne.s32.totalorder %s35, %s36
      %p50 = scmp.eq.s32.totalorder %s28, 1
      %p51 = por %p49, %p50
      %p53 = scmp.ne.s32.totalorder %s36, %s52
      %p54 = scmp.eq.s32.totalorder %s28, 0
      %p55 = por %p53, %p54
      %s57 = sadd.s32 %s56, 1
      %p60 = scmp.eq.s32.totalorder %s22, 1
      %p61 = scmp.ne.s32.totalorder %s56, %s58
      %p62 = scmp.eq.s32.totalorder %s22, 0
      %p63 = por %p61, %p62
      %p64 = scmp.ne.s32.totalorder %s56, %s58
      %p65 = scmp.eq.s32.totalorder %s27, 1
      %p66 = por %p64, %p65
      %p67 = scmp.ne.s32.totalorder %s58, %s59
      %p68 = scmp.eq.s32.totalorder %s27, 0
      %p69 = por %p67, %p68
      %p70 = scmp.ne.s32.totalorder %s58, %s59
      %p71 = scmp.eq.s32.totalorder %s28, 1
      %p72 = por %p70, %p71
      %p74 = scmp.ne.s32.totalorder %s59, %s73
      %p75 = scmp.eq.s32.totalorder %s28, 0
      %p76 = por %p74, %p75
      %s78 = sadd.s32 %s77, 1
      %p81 = scmp.eq.s32.totalorder %s22, 1
      %p82 = scmp.ne.s32.totalorder %s77, %s79
      %p83 = scmp.eq.s32.totalorder %s22, 0
      %p84 = por %p82, %p83
      %p85 = scmp.ne.s32.totalorder %s77, %s79
      %p86 = scmp.eq.s32.totalorder %s27, 1
      %p87 = por %p85, %p86
      %p88 = scmp.ne.s32.totalorder %s79, %s80
      %p89 = scmp.eq.s32.totalorder %s27, 0
      %p90 = por %p88, %p89
      %p91 = scmp.ne.s32.totalorder %s79, %s80
      %p92 = scmp.eq.s32.totalorder %s28, 1
      %p93 = por %p91, %p92
      %p95 = scmp.ne.s32.totalorder %s80, %s94
      %p96 = scmp.eq.s32.totalorder %s28, 0
      %p97 = por %p95, %p96
      %s99 = sadd.s32 %s98, 1
      %p102 = scmp.eq.s32.totalorder %s22, 1
      %p103 = scmp.ne.s32.totalorder %s98, %s100
      %p104 = scmp.eq.s32.totalorder %s22, 0
      %p105 = por %p103, %p104
      %p106 = scmp.ne.s32.totalorder %s98, %s100
      %p107 = scmp.eq.s32.totalorder %s27, 1
      %p108 = por %p106, %p107
      %p109 = scmp.ne.s32.totalorder %s100, %s101
      %p110 = scmp.eq.s32.totalorder %s27, 0
      %p111 = por %p109, %p110
      %p112 = scmp.ne.s32.totalorder %s100, %s101
      %p113 = scmp.eq.s32.totalorder %s28, 1
      %p114 = por %p112, %p113
      %p116 = scmp.ne.s32.totalorder %s101, %s115
      %p117 = scmp.eq.s32.totalorder %s28, 0
      %p118 = por %p116, %p117
      %s120 = sadd.s32 %s119, 1
      %p123 = scmp.eq.s32.totalorder %s22, 1
      %p124 = scmp.ne.s32.totalorder %s119, %s121
      %p125 = scmp.eq.s32.totalorder %s22, 0
      %p126 = por %p124, %p125
      %p127 = scmp.ne.s32.totalorder %s119, %s121
      %p128 = scmp.eq.s32.totalorder %s27, 1
      %p129 = por %p127, %p128
      %p130 = scmp.ne.s32.totalorder %s121, %s122
      %p131 = scmp.eq.s32.totalorder %s27, 0
      %p132 = por %p130, %p131
      %p133 = scmp.ne.s32.totalorder %s121, %s122
      %p134 = scmp.eq.s32.totalorder %s28, 1
      %p135 = por %p133, %p134
      %p137 = scmp.ne.s32.totalorder %s122, %s136
      %p138 = scmp.eq.s32.totalorder %s28, 0
      %p139 = por %p137, %p138
      %s141 = sadd.s32 %s140, 1
      %p144 = scmp.eq.s32.totalorder %s22, 1
      %p145 = scmp.ne.s32.totalorder %s140, %s142
      %p146 = scmp.eq.s32.totalorder %s22, 0
      %p147 = por %p145, %p146
      %p148 = scmp.ne.s32.totalorder %s140, %s142
      %p149 = scmp.eq.s32.totalorder %s27, 1
      %p150 = por %p148, %p149
      %p151 = scmp.ne.s32.totalorder %s142, %s143
      %p152 = scmp.eq.s32.totalorder %s27, 0
      %p153 = por %p151, %p152
      %p154 = scmp.ne.s32.totalorder %s142, %s143
      %p155 = scmp.eq.s32.totalorder %s28, 1
      %p156 = por %p154, %p155
      %p158 = scmp.ne.s32.totalorder %s143, %s157
      %p159 = scmp.eq.s32.totalorder %s28, 0
      %p160 = por %p158, %p159
      %s162 = sadd.s32 %s161, 1
      %p165 = scmp.eq.s32.totalorder %s22, 1
      %p166 = scmp.ne.s32.totalorder %s161, %s163
      %p167 = scmp.eq.s32.totalorder %s22, 0
      %p168 = por %p166, %p167
      %p169 = scmp.ne.s32.totalorder %s161, %s163
      %p170 = scmp.eq.s32.totalorder %s27, 1
      %p171 = por %p169, %p170
      %p172 = scmp.ne.s32.totalorder %s163, %s164
      %p173 = scmp.eq.s32.totalorder %s27, 0
      %p174 = por %p172, %p173
      %p175 = scmp.ne.s32.totalorder %s163, %s164
      %p176 = scmp.eq.s32.totalorder %s28, 1
      %p177 = por %p175, %p176
      %p179 = scmp.ne.s32.totalorder %s164, %s178
      %p180 = scmp.eq.s32.totalorder %s28, 0
      %p181 = por %p179, %p180
      %s183 = sadd.s32 %s182, 1
      %p186 = scmp.eq.s32.totalorder %s22, 1
      %p187 = scmp.ne.s32.totalorder %s182, %s184
      %p188 = scmp.eq.s32.totalorder %s22, 0
      %p189 = por %p187, %p188
      %p190 = scmp.ne.s32.totalorder %s182, %s184
      %p191 = scmp.eq.s32.totalorder %s27, 1
      %p192 = por %p190, %p191
      %p193 = scmp.ne.s32.totalorder %s184, %s185
      %p194 = scmp.eq.s32.totalorder %s27, 0
      %p195 = por %p193, %p194
      %p196 = scmp.ne.s32.totalorder %s184, %s185
      %p197 = scmp.eq.s32.totalorder %s28, 1
      %p198 = por %p196, %p197
      %p200 = scmp.ne.s32.totalorder %s185, %s199
      %p201 = scmp.eq.s32.totalorder %s28, 0
      %p202 = por %p200, %p201
      %s204 = sadd.s32 %s203, 1
      %p207 = scmp.eq.s32.totalorder %s22, 1
      %p208 = scmp.ne.s32.totalorder %s203, %s205
      %p209 = scmp.eq.s32.totalorder %s22, 0
      %p210 = por %p208, %p209
      %p211 = scmp.ne.s32.totalorder %s203, %s205
      %p212 = scmp.eq.s32.totalorder %s27, 1
      %p213 = por %p211, %p212
      %p214 = scmp.ne.s32.totalorder %s205, %s206
      %p215 = scmp.eq.s32.totalorder %s27, 0
      %p216 = por %p214, %p215
      %p217 = scmp.ne.s32.totalorder %s205, %s206
      %p218 = scmp.eq.s32.totalorder %s28, 1
      %p219 = por %p217, %p218
      %p221 = scmp.ne.s32.totalorder %s206, %s220
      %p222 = scmp.eq.s32.totalorder %s28, 0
      %p223 = por %p221, %p222
      %s225 = sadd.s32 %s224, 1
      %p228 = scmp.eq.s32.totalorder %s22, 1
      %p229 = scmp.ne.s32.totalorder %s224, %s226
      %p230 = scmp.eq.s32.totalorder %s22, 0
      %p231 = por %p229, %p230
      %p232 = scmp.ne.s32.totalorder %s224, %s226
      %p233 = scmp.eq.s32.totalorder %s27, 1
      %p234 = por %p232, %p233
      %p235 = scmp.ne.s32.totalorder %s226, %s227
      %p236 = scmp.eq.s32.totalorder %s27, 0
      %p237 = por %p235, %p236
      %p238 = scmp.ne.s32.totalorder %s226, %s227
      %p239 = scmp.eq.s32.totalorder %s28, 1
      %p240 = por %p238, %p239
      %p242 = scmp.ne.s32.totalorder %s227, %s241
      %p243 = scmp.eq.s32.totalorder %s28, 0
      %p244 = por %p242, %p243
      %s246 = sadd.s32 %s245, 1
      %p249 = scmp.eq.s32.totalorder %s22, 1
      %p250 = scmp.ne.s32.totalorder %s245, %s247
      %p251 = scmp.eq.s32.totalorder %s22, 0
      %p252 = por %p250, %p251
      %p253 = scmp.ne.s32.totalorder %s245, %s247
      %p254 = scmp.eq.s32.totalorder %s27, 1
      %p255 = por %p253, %p254
      %p256 = scmp.ne.s32.totalorder %s247, %s248
      %p257 = scmp.eq.s32.totalorder %s27, 0
      %p258 = por %p256, %p257
      %p259 = scmp.ne.s32.totalorder %s247, %s248
      %p260 = scmp.eq.s32.totalorder %s28, 1
      %p261 = por %p259, %p260
      %p263 = scmp.ne.s32.totalorder %s248, %s262
      %p264 = scmp.eq.s32.totalorder %s28, 0
      %p265 = por %p263, %p264
      %s267 = sadd.s32 %s266, 1
      %p270 = scmp.eq.s32.totalorder %s22, 1
      %p271 = scmp.ne.s32.totalorder %s266, %s268
      %p272 = scmp.eq.s32.totalorder %s22, 0
      %p273 = por %p271, %p272
      %p274 = scmp.ne.s32.totalorder %s266, %s268
      %p275 = scmp.eq.s32.totalorder %s27, 1
      %p276 = por %p274, %p275
      %p277 = scmp.ne.s32.totalorder %s268, %s269
      %p278 = scmp.eq.s32.totalorder %s27, 0
      %p279 = por %p277, %p278
      %p280 = scmp.ne.s32.totalorder %s268, %s269
      %p281 = scmp.eq.s32.totalorder %s28, 1
      %p282 = por %p280, %p281
      %p284 = scmp.ne.s32.totalorder %s269, %s283
      %p285 = scmp.eq.s32.totalorder %s28, 0
      %p286 = por %p284, %p285
      %s288 = sadd.s32 %s287, 1
      %p291 = scmp.eq.s32.totalorder %s22, 1
      %p292 = scmp.ne.s32.totalorder %s287, %s289
      %p293 = scmp.eq.s32.totalorder %s22, 0
      %p294 = por %p292, %p293
      %p295 = scmp.ne.s32.totalorder %s287, %s289
      %p296 = scmp.eq.s32.totalorder %s27, 1
      %p297 = por %p295, %p296
      %p298 = scmp.ne.s32.totalorder %s289, %s290
      %p299 = scmp.eq.s32.totalorder %s27, 0
      %p300 = por %p298, %p299
      %p301 = scmp.ne.s32.totalorder %s289, %s290
      %p302 = scmp.eq.s32.totalorder %s28, 1
      %p303 = por %p301, %p302
      %p305 = scmp.ne.s32.totalorder %s290, %s304
      %p306 = scmp.eq.s32.totalorder %s28, 0
      %p307 = por %p305, %p306
      %s308 = ssub.s32 %s22, %s29
      %p309 = scmp.eq.s32.totalorder %s308, 0
      %s311 = sadd.s32 %s310, 1
      %s312 = scalar_select %p309, %s310, %s311
      %p315 = pneg %p309
      %p316 = scmp.eq.s32.totalorder %s22, 1
      %p317 = por %p315, %p316
      %p318 = scmp.ne.s32.totalorder %s310, %s313
      %p319 = scmp.eq.s32.totalorder %s22, 0
      %p320 = por %p318, %p319
      %p321 = scmp.ne.s32.totalorder %s310, %s313
      %p322 = scmp.eq.s32.totalorder %s27, 1
      %p323 = por %p321, %p322
      %p324 = scmp.ne.s32.totalorder %s313, %s314
      %p325 = scmp.eq.s32.totalorder %s27, 0
      %p326 = por %p324, %p325
      %p327 = scmp.ne.s32.totalorder %s313, %s314
      %p328 = scmp.eq.s32.totalorder %s28, 1
      %p329 = por %p327, %p328
      %p331 = scmp.ne.s32.totalorder %s314, %s330
      %p332 = scmp.eq.s32.totalorder %s28, 0
      %p333 = por %p331, %p332
      %p334 = scmp.le.s32.totalorder 1, %s22
      %p335 = scmp.lt.s32.totalorder %s22, 3
      %p336 = pnand %p334, %p335
      %p337 = pneg %p336
      // Predicated region
      $region9: #{tpu_custom_call.1} parent=5 // pred_check
        _
      $region10: #{tpu_custom_call.1} parent=5 // pred_check_branch
        %339 = sbr.rel (%p336) target = $region12
      $region11: #{tpu_custom_call.1} parent=5 // pred_region
        %s340 = ssub.s32 %s22, 1
        // Predicated region
        $region13: #{tpu_custom_call.1} parent=11 // pred_check
          %p341 = pneg %p69
        $region14: #{tpu_custom_call.1} parent=11 // pred_check_branch
          %343 = sbr.rel (%p341) target = $region16
        $region15: #{tpu_custom_call.1} parent=11 // pred_region
          _
        $region16: #{tpu_custom_call.1} parent=11 // pred_fallthru
          _
        // Predicated region
        $region17: #{tpu_custom_call.1} parent=11 // pred_check
          %p344 = pneg %p90
        $region18: #{tpu_custom_call.1} parent=11 // pred_check_branch
          %346 = sbr.rel (%p344) target = $region20
        $region19: #{tpu_custom_call.1} parent=11 // pred_region
          _
        $region20: #{tpu_custom_call.1} parent=11 // pred_fallthru
          _
        // Predicated region
        $region21: #{tpu_custom_call.1} parent=11 // pred_check
          %p347 = pneg %p111
        $region22: #{tpu_custom_call.1} parent=11 // pred_check_branch
          %349 = sbr.rel (%p347) target = $region24
        $region23: #{tpu_custom_call.1} parent=11 // pred_region
          _
        $region24: #{tpu_custom_call.1} parent=11 // pred_fallthru
          _
        // Predicated region
        $region25: #{tpu_custom_call.1} parent=11 // pred_check
          %p350 = pneg %p132
        $region26: #{tpu_custom_call.1} parent=11 // pred_check_branch
          %352 = sbr.rel (%p350) target = $region28
        $region27: #{tpu_custom_call.1} parent=11 // pred_region
          _
        $region28: #{tpu_custom_call.1} parent=11 // pred_fallthru
          _
        // Predicated region
        $region29: #{tpu_custom_call.1} parent=11 // pred_check
          %p353 = pneg %p153
        $region30: #{tpu_custom_call.1} parent=11 // pred_check_branch
          %355 = sbr.rel (%p353) target = $region32
        $region31: #{tpu_custom_call.1} parent=11 // pred_region
          _
        $region32: #{tpu_custom_call.1} parent=11 // pred_fallthru
          _
        // Predicated region
        $region33: #{tpu_custom_call.1} parent=11 // pred_check
          %p356 = pneg %p174
        $region34: #{tpu_custom_call.1} parent=11 // pred_check_branch
          %358 = sbr.rel (%p356) target = $region36
        $region35: #{tpu_custom_call.1} parent=11 // pred_region
          _
        $region36: #{tpu_custom_call.1} parent=11 // pred_fallthru
          _
        // Predicated region
        $region37: #{tpu_custom_call.1} parent=11 // pred_check
          %p359 = pneg %p195
        $region38: #{tpu_custom_call.1} parent=11 // pred_check_branch
          %361 = sbr.rel (%p359) target = $region40
        $region39: #{tpu_custom_call.1} parent=11 // pred_region
          _
        $region40: #{tpu_custom_call.1} parent=11 // pred_fallthru
          _
        // Predicated region
        $region41: #{tpu_custom_call.1} parent=11 // pred_check
          %p362 = pneg %p216
        $region42: #{tpu_custom_call.1} parent=11 // pred_check_branch
          %364 = sbr.rel (%p362) target = $region44
        $region43: #{tpu_custom_call.1} parent=11 // pred_region
          _
        $region44: #{tpu_custom_call.1} parent=11 // pred_fallthru
          _
        // Predicated region
        $region45: #{tpu_custom_call.1} parent=11 // pred_check
          %p365 = pneg %p237
        $region46: #{tpu_custom_call.1} parent=11 // pred_check_branch
          %367 = sbr.rel (%p365) target = $region48
        $region47: #{tpu_custom_call.1} parent=11 // pred_region
          _
        $region48: #{tpu_custom_call.1} parent=11 // pred_fallthru
          _
        // Predicated region
        $region49: #{tpu_custom_call.1} parent=11 // pred_check
          %p368 = pneg %p258
        $region50: #{tpu_custom_call.1} parent=11 // pred_check_branch
          %370 = sbr.rel (%p368) target = $region52
        $region51: #{tpu_custom_call.1} parent=11 // pred_region
          _
        $region52: #{tpu_custom_call.1} parent=11 // pred_fallthru
          _
        // Predicated region
        $region53: #{tpu_custom_call.1} parent=11 // pred_check
          %p371 = pneg %p279
        $region54: #{tpu_custom_call.1} parent=11 // pred_check_branch
          %373 = sbr.rel (%p371) target = $region56
        $region55: #{tpu_custom_call.1} parent=11 // pred_region
          _
        $region56: #{tpu_custom_call.1} parent=11 // pred_fallthru
          _
        // Predicated region
        $region57: #{tpu_custom_call.1} parent=11 // pred_check
          %p374 = pneg %p300
        $region58: #{tpu_custom_call.1} parent=11 // pred_check_branch
          %376 = sbr.rel (%p374) target = $region60
        $region59: #{tpu_custom_call.1} parent=11 // pred_region
          _
        $region60: #{tpu_custom_call.1} parent=11 // pred_fallthru
          _
      $region12: #{tpu_custom_call.1} parent=5 // pred_fallthru
        _
      %p377 = scmp.lt.s32.totalorder %s22, 2
      // Predicated region
      $region61: #{tpu_custom_call.1} parent=5 // pred_check
        %p378 = pneg %p377
      $region62: #{tpu_custom_call.1} parent=5 // pred_check_branch
        %380 = sbr.rel (%p378) target = $region64
      $region63: #{tpu_custom_call.1} parent=5 // pred_region
        // Predicated region
        $region65: #{tpu_custom_call.1} parent=63 // pred_check
          %p381 = pneg %p42
        $region66: #{tpu_custom_call.1} parent=63 // pred_check_branch
          %383 = sbr.rel (%p381) target = $region68
        $region67: #{tpu_custom_call.1} parent=63 // pred_region
          %p384 = scmp.lt.s32.totalorder %s22, 1
          %s385 = scalar_select %p384, %s22, 1
          %s386 = smul.addr %s385, 2
          %s387 = smul.addr %s386, 4
          %s388 = scalar_lea.vmem %s0, %s387
        $region68: #{tpu_custom_call.1} parent=63 // pred_fallthru
          _
      $region64: #{tpu_custom_call.1} parent=5 // pred_fallthru
        _
      %p389 = scmp.le.s32.totalorder 1, %s22
      %p390 = scmp.lt.s32.totalorder %s22, 3
      %p391 = pnand %p389, %p390
      %p392 = pneg %p391
      // Predicated region
      $region69: #{tpu_custom_call.1} parent=5 // pred_check
        _
      $region70: #{tpu_custom_call.1} parent=5 // pred_check_branch
        %394 = sbr.rel (%p391) target = $region72
      $region71: #{tpu_custom_call.1} parent=5 // pred_region
        %s395 = ssub.s32 %s22, 1
        %p396 = scmp.lt.s32.totalorder %s27, 1
        %s397 = scalar_select %p396, %s27, 1
        %s398 = smul.addr %s397, 2
        %s399 = smul.addr %s398, 4
        %s400 = scalar_lea.vmem %s0, %s399
        %p401 = pneg %p48
        %p402 = pneg %p45
        %p403 = pneg %p69
        %p404 = pneg %p66
        %p405 = pneg %p90
        %p406 = pneg %p87
        %p407 = pneg %p111
        %p408 = pneg %p108
        %p409 = pneg %p132
        %p410 = pneg %p129
        %p411 = pneg %p153
        %p412 = pneg %p150
        %p413 = pneg %p174
        %p414 = pneg %p171
        %p415 = pneg %p195
        %p416 = pneg %p192
        %p417 = pneg %p216
        %p418 = pneg %p213
        %p419 = pneg %p237
        %p420 = pneg %p234
        %p421 = pneg %p258
        %p422 = pneg %p255
        %p423 = pneg %p279
        %p424 = pneg %p276
        %p425 = pneg %p300
        %p426 = pneg %p297
        %p427 = pneg %p326
        %p428 = pneg %p323
        %s429 = sand.u32 %s313, 1
        %s430 = scalar_lea.sflag [#allocation3], %s429
        %s431 = sand.u32 %s313, 1
        %s432 = smul.addr %s431, 8
        %s433 = scalar_lea.vmem [#allocation2], %s432
        %p434 = scmp.lt.s32.totalorder %s27, 1
        %s435 = scalar_select %p434, %s27, 1
        %s436 = smul.addr %s435, 2
        %s437 = smul.addr %s436, 4
        %s438 = scalar_lea.vmem %s0, %s437
        %v439 = vld [vmem:[%s1] sm:$0xff]
        %v440 = vld [vmem:[%s2] sm:$0xf]
        %v441 = vld [vmem:[%s3] sm:$0xf]
        %v442 = vld [vmem:[%s8] sm:$0xf]
        %v443 = vld [vmem:[%s9] sm:$0xf]
        %v444 = vld [vmem:[%s4] sm:$0xff]
        %v445 = vld [vmem:[%s4 + $0x8] sm:$0xf]
        %v446 = vld [vmem:[%s5] sm:$0xff]
        %v447 = vld [vmem:[%s5 + $0x8] sm:$0xf]
        %v448 = vld [vmem:[%s6] sm:$0x3]
        %v449 = vld [vmem:[%s7] sm:$0xf]
        %v450 = vld [vmem:[%s10] sm:$0xff]
        %v451 = vld [vmem:[%s10 + $0x8] sm:$0xff]
        %v452 = vld [vmem:[%s11] sm:$0xff]
        %v453 = vld [vmem:[%s11 + $0x8] sm:$0xff]
        %v454 = vld [vmem:[%s12] sm:$0xf]
        %v455 = vld [vmem:[%s438] sm:$0xff]
        %v457 = vcombine.high %v455, %v455
        %vm459 = vcmask 1043456
        %v460 = vsel %vm459, %v455, 0.0
        %v461 = vrot.slane %v460, 4
        %v462 = vadd.f32 %v460, %v461
        %v463 = vrot.slane %v462, 2
        %v464 = vadd.f32 %v462, %v463
        %v465 = vrot.slane %v464, 1
        %v466 = vadd.f32 %v464, %v465
        %v467 = vsel %vm459, %v457, 0.0
        %v468 = vrot.slane %v467, 4
        %v469 = vadd.f32 %v467, %v468
        %v470 = vrot.slane %v469, 2
        %v471 = vadd.f32 %v469, %v470
        %v472 = vrot.slane %v471, 1
        %v473 = vadd.f32 %v471, %v472
        %v474 = vrcp.pop 4.0
        %v475 = vmul.f32 %v466, %v474
        %v476 = vmul.f32 %v473, %v474
        %v479 = vcombine.low %v475, %v476
        %v481 = vsub.f32 %v455, %v479
        %v482 = vmul.f32 %v481, %v481
        %v484 = vcombine.high %v482, %v482
        %v486 = vsel %vm459, %v482, 0.0
        %v487 = vrot.slane %v486, 4
        %v488 = vadd.f32 %v486, %v487
        %v489 = vrot.slane %v488, 2
        %v490 = vadd.f32 %v488, %v489
        %v491 = vrot.slane %v490, 1
        %v492 = vadd.f32 %v490, %v491
        %v493 = vsel %vm459, %v484, 0.0
        %v494 = vrot.slane %v493, 4
        %v495 = vadd.f32 %v493, %v494
        %v496 = vrot.slane %v495, 2
        %v497 = vadd.f32 %v495, %v496
        %v498 = vrot.slane %v497, 1
        %v499 = vadd.f32 %v497, %v498
        %v500 = vmul.f32 %v492, %v474
        %v501 = vmul.f32 %v499, %v474
        %v502 = vadd.f32 %v500, 1e-05
        %v503 = vadd.f32 %v501, 1e-05
        %v504 = vrsqrt.pop %v502
        %v505 = vrsqrt.pop %v503
        %v508 = vcombine.low %v504, %v505
        %v510 = vmul.f32 %v481, %v508
        %512 = vset.pattern.permute.xlu0 0
        %513 = vperm.xlu0 %512, %v440
        %v514 = vpop.permute.xlu0 %513
        %v516 = vunpack.c.l.s4 839922192
        %v517 = vunpack.c.0.s8 %v516
        %v518 = vlaneseq
        %v519 = vshrl.u32 %v518, 7
        %v520 = vsub.s32 %v517, %v519
        %v521 = vrot.slane %v514, %v520
        %v523 = vmul.f32 %v510, %v521
        %525 = vset.pattern.permute.xlu0 0
        %526 = vperm.xlu0 %525, %v441
        %v527 = vpop.permute.xlu0 %526
        %v529 = vunpack.c.l.s4 839922192
        %v530 = vunpack.c.0.s8 %v529
        %v531 = vlaneseq
        %v532 = vshrl.u32 %v531, 7
        %v533 = vsub.s32 %v530, %v532
        %v534 = vrot.slane %v527, %v533
        %v536 = vadd.f32 %v523, %v534
        %538 = vset.pattern.permute.xlu0 0
        %539 = vperm.xlu0 %538, %v444
        %v540 = vpop.permute.xlu0 %539
        %543 = vset.pattern.permute.xlu0 0
        %544 = vperm.xlu0 %543, %v445
        %v545 = vpop.permute.xlu0 %544
        %v548 = vlaneseq
        %v549 = vshrl.u32 %v548, 7
        %v550 = vsub.s32 0, %v549
        %v551 = vrot.slane %v536, %v550
        %v552 = vlaneseq
        %v553 = vshrl.u32 %v552, 7
        %v554 = vsub.s32 4, %v553
        %v555 = vrot.slane %v536, %v554
        %v558 = vlaneseq
        %v559 = vshrl.u32 %v558, 7
        %v560 = vsub.s32 0, %v559
        %v561 = vrot.slane %v551, %v560
        %v562 = vlaneseq
        %v563 = vshrl.u32 %v562, 7
        %v564 = vsub.s32 0, %v563
        %v565 = vrot.slane %v555, %v564
        %v566 = vmul.f32 %v540, %v561
        %v567 = vmul.f32 %v540, %v565
        %v568 = vmul.f32 %v545, %v561
        %v569 = vmul.f32 %v545, %v565
        %570 = vset.pattern.permute.xlu0 1
        %571 = vperm.xlu0 %570, %v444
        %v572 = vpop.permute.xlu0 %571
        %574 = vset.pattern.permute.xlu0 1
        %575 = vperm.xlu0 %574, %v445
        %v576 = vpop.permute.xlu0 %575
        %v578 = vlaneseq
        %v579 = vshrl.u32 %v578, 7
        %v580 = vsub.s32 1, %v579
        %v581 = vrot.slane %v536, %v580
        %v582 = vlaneseq
        %v583 = vshrl.u32 %v582, 7
        %v584 = vsub.s32 5, %v583
        %v585 = vrot.slane %v536, %v584
        %v588 = vlaneseq
        %v589 = vshrl.u32 %v588, 7
        %v590 = vsub.s32 1, %v589
        %v591 = vrot.slane %v581, %v590
        %v592 = vlaneseq
        %v593 = vshrl.u32 %v592, 7
        %v594 = vsub.s32 1, %v593
        %v595 = vrot.slane %v585, %v594
        %v596 = vmul.f32 %v572, %v591
        %v597 = vmul.f32 %v572, %v595
        %v598 = vmul.f32 %v576, %v591
        %v599 = vmul.f32 %v576, %v595
        %v600 = vadd.f32 %v566, %v596
        %v601 = vadd.f32 %v567, %v597
        %v602 = vadd.f32 %v568, %v598
        %v603 = vadd.f32 %v569, %v599
        %604 = vset.pattern.permute.xlu0 2
        %605 = vperm.xlu0 %604, %v444
        %v606 = vpop.permute.xlu0 %605
        %608 = vset.pattern.permute.xlu0 2
        %609 = vperm.xlu0 %608, %v445
        %v610 = vpop.permute.xlu0 %609
        %v612 = vlaneseq
        %v613 = vshrl.u32 %v612, 7
        %v614 = vsub.s32 2, %v613
        %v615 = vrot.slane %v536, %v614
        %v616 = vlaneseq
        %v617 = vshrl.u32 %v616, 7
        %v618 = vsub.s32 6, %v617
        %v619 = vrot.slane %v536, %v618
        %v622 = vlaneseq
        %v623 = vshrl.u32 %v622, 7
        %v624 = vsub.s32 2, %v623
        %v625 = vrot.slane %v615, %v624
        %v626 = vlaneseq
        %v627 = vshrl.u32 %v626, 7
        %v628 = vsub.s32 2, %v627
        %v629 = vrot.slane %v619, %v628
        %v630 = vmul.f32 %v606, %v625
        %v631 = vmul.f32 %v606, %v629
        %v632 = vmul.f32 %v610, %v625
        %v633 = vmul.f32 %v610, %v629
        %v634 = vadd.f32 %v600, %v630
        %v635 = vadd.f32 %v601, %v631
        %v636 = vadd.f32 %v602, %v632
        %v637 = vadd.f32 %v603, %v633
        %638 = vset.pattern.permute.xlu0 3
        %639 = vperm.xlu0 %638, %v444
        %v640 = vpop.permute.xlu0 %639
        %642 = vset.pattern.permute.xlu0 3
        %643 = vperm.xlu0 %642, %v445
        %v644 = vpop.permute.xlu0 %643
        %v646 = vlaneseq
        %v647 = vshrl.u32 %v646, 7
        %v648 = vsub.s32 3, %v647
        %v649 = vrot.slane %v536, %v648
        %v650 = vlaneseq
        %v651 = vshrl.u32 %v650, 7
        %v652 = vsub.s32 7, %v651
        %v653 = vrot.slane %v536, %v652
        %v656 = vlaneseq
        %v657 = vshrl.u32 %v656, 7
        %v658 = vsub.s32 3, %v657
        %v659 = vrot.slane %v649, %v658
        %v660 = vlaneseq
        %v661 = vshrl.u32 %v660, 7
        %v662 = vsub.s32 3, %v661
        %v663 = vrot.slane %v653, %v662
        %v664 = vmul.f32 %v640, %v659
        %v665 = vmul.f32 %v640, %v663
        %v666 = vmul.f32 %v644, %v659
        %v667 = vmul.f32 %v644, %v663
        %v668 = vadd.f32 %v634, %v664
        %v669 = vadd.f32 %v635, %v665
        %v670 = vadd.f32 %v636, %v666
        %v671 = vadd.f32 %v637, %v667
        %672 = vrot.lane.b32.xlu0 %v668, 16
        %v673 = vpop.permute.xlu0 %672
        %674 = vrot.lane.b32.xlu0 %v670, 16
        %v675 = vpop.permute.xlu0 %674
        %676 = vrot.lane.b32.xlu0 %v669, 16
        %v677 = vpop.permute.xlu0 %676
        %678 = vrot.lane.b32.xlu0 %v671, 16
        %v679 = vpop.permute.xlu0 %678
        %v680 = vlaneseq
        %v681 = vand.u32 %v680, 127
        %vm682 = vcmp.lt.s32.totalorder %v681, 16
        %v683 = vsel %vm682, %v673, %v677
        %v684 = vsel %vm682, %v675, %v679
        %v685 = vsel %vm682, %v677, %v673
        %v686 = vsel %vm682, %v679, %v675
        %v688 = vlaneseq
        %v689 = vshrl.u32 %v688, 7
        %v690 = vsub.s32 0, %v689
        %v691 = vrot.slane %v439, %v690
        %v692 = vlaneseq
        %v693 = vshrl.u32 %v692, 7
        %v694 = vsub.s32 4, %v693
        %v695 = vrot.slane %v439, %v694
        %v698 = vlaneseq
        %v699 = vshrl.u32 %v698, 7
        %v700 = vsub.s32 0, %v699
        %v701 = vrot.slane %v691, %v700
        %v702 = vlaneseq
        %v703 = vshrl.u32 %v702, 7
        %v704 = vsub.s32 0, %v703
        %v705 = vrot.slane %v695, %v704
        %v706 = vmul.f32 %v685, %v701
        %v707 = vmul.f32 %v683, %v705
        %v708 = vmul.f32 %v686, %v701
        %v709 = vmul.f32 %v684, %v705
        %710 = vrot.lane.b32.xlu0 %v668, 112
        %v711 = vpop.permute.xlu0 %710
        %712 = vrot.lane.b32.xlu0 %v670, 112
        %v713 = vpop.permute.xlu0 %712
        %714 = vrot.lane.b32.xlu0 %v669, 112
        %v715 = vpop.permute.xlu0 %714
        %716 = vrot.lane.b32.xlu0 %v671, 112
        %v717 = vpop.permute.xlu0 %716
        %vm718 = vcmp.lt.s32.totalorder %v681, 112
        %v719 = vsel %vm718, %v711, %v715
        %v720 = vsel %vm718, %v713, %v717
        %v721 = vsel %vm718, %v715, %v711
        %v722 = vsel %vm718, %v717, %v713
        %v723 = vlaneseq
        %v724 = vshrl.u32 %v723, 7
        %v725 = vsub.s32 1, %v724
        %v726 = vrot.slane %v439, %v725
        %v727 = vlaneseq
        %v728 = vshrl.u32 %v727, 7
        %v729 = vsub.s32 5, %v728
        %v730 = vrot.slane %v439, %v729
        %v733 = vlaneseq
        %v734 = vshrl.u32 %v733, 7
        %v735 = vsub.s32 1, %v734
        %v736 = vrot.slane %v726, %v735
        %v737 = vlaneseq
        %v738 = vshrl.u32 %v737, 7
        %v739 = vsub.s32 1, %v738
        %v740 = vrot.slane %v730, %v739
        %v741 = vmul.f32 %v719, %v736
        %v742 = vmul.f32 %v721, %v740
        %v743 = vmul.f32 %v720, %v736
        %v744 = vmul.f32 %v722, %v740
        %746 = vset.pattern.permute.xlu0 1
        %747 = vperm.xlu0 %746, %v446
        %v748 = vpop.permute.xlu0 %747
        %751 = vset.pattern.permute.xlu0 1
        %752 = vperm.xlu0 %751, %v447
        %v753 = vpop.permute.xlu0 %752
        %v755 = vmul.f32 %v706, %v748
        %v756 = vmul.f32 %v707, %v748
        %v757 = vmul.f32 %v708, %v753
        %v758 = vmul.f32 %v709, %v753
        %759 = vset.pattern.permute.xlu0 4
        %760 = vperm.xlu0 %759, %v446
        %v761 = vpop.permute.xlu0 %760
        %763 = vset.pattern.permute.xlu0 4
        %764 = vperm.xlu0 %763, %v447
        %v765 = vpop.permute.xlu0 %764
        %v767 = vmul.f32 %v668, %v761
        %v768 = vmul.f32 %v669, %v761
        %v769 = vmul.f32 %v670, %v765
        %v770 = vmul.f32 %v671, %v765
        %v771 = vadd.f32 %v755, %v767
        %v772 = vadd.f32 %v756, %v768
        %v773 = vadd.f32 %v757, %v769
        %v774 = vadd.f32 %v758, %v770
        %775 = vset.pattern.permute.xlu0 7
        %776 = vperm.xlu0 %775, %v446
        %v777 = vpop.permute.xlu0 %776
        %779 = vset.pattern.permute.xlu0 7
        %780 = vperm.xlu0 %779, %v447
        %v781 = vpop.permute.xlu0 %780
        %v783 = vmul.f32 %v741, %v777
        %v784 = vmul.f32 %v742, %v777
        %v785 = vmul.f32 %v743, %v781
        %v786 = vmul.f32 %v744, %v781
        %v787 = vadd.f32 %v771, %v783
        %v788 = vadd.f32 %v772, %v784
        %v789 = vadd.f32 %v773, %v785
        %v790 = vadd.f32 %v774, %v786
        %791 = vset.pattern.permute.xlu0 0
        %792 = vperm.xlu0 %791, %v446
        %v793 = vpop.permute.xlu0 %792
        %795 = vset.pattern.permute.xlu0 0
        %796 = vperm.xlu0 %795, %v447
        %v797 = vpop.permute.xlu0 %796
        %v799 = vmul.f32 %v706, %v793
        %v800 = vmul.f32 %v707, %v793
        %v801 = vmul.f32 %v708, %v797
        %v802 = vmul.f32 %v709, %v797
        %803 = vset.pattern.permute.xlu0 3
        %804 = vperm.xlu0 %803, %v446
        %v805 = vpop.permute.xlu0 %804
        %807 = vset.pattern.permute.xlu0 3
        %808 = vperm.xlu0 %807, %v447
        %v809 = vpop.permute.xlu0 %808
        %v811 = vmul.f32 %v668, %v805
        %v812 = vmul.f32 %v669, %v805
        %v813 = vmul.f32 %v670, %v809
        %v814 = vmul.f32 %v671, %v809
        %v815 = vadd.f32 %v799, %v811
        %v816 = vadd.f32 %v800, %v812
        %v817 = vadd.f32 %v801, %v813
        %v818 = vadd.f32 %v802, %v814
        %819 = vset.pattern.permute.xlu0 6
        %820 = vperm.xlu0 %819, %v446
        %v821 = vpop.permute.xlu0 %820
        %823 = vset.pattern.permute.xlu0 6
        %824 = vperm.xlu0 %823, %v447
        %v825 = vpop.permute.xlu0 %824
        %v827 = vmul.f32 %v741, %v821
        %v828 = vmul.f32 %v742, %v821
        %v829 = vmul.f32 %v743, %v825
        %v830 = vmul.f32 %v744, %v825
        %v831 = vadd.f32 %v815, %v827
        %v832 = vadd.f32 %v816, %v828
        %v833 = vadd.f32 %v817, %v829
        %v834 = vadd.f32 %v818, %v830
        %835 = vrot.lane.b32.xlu0 %v831, 1
        %v836 = vpop.permute.xlu0 %835
        %837 = vrot.lane.b32.xlu0 %v833, 1
        %v838 = vpop.permute.xlu0 %837
        %839 = vrot.lane.b32.xlu0 %v832, 1
        %v840 = vpop.permute.xlu0 %839
        %841 = vrot.lane.b32.xlu0 %v834, 1
        %v842 = vpop.permute.xlu0 %841
        %vm843 = vcmp.lt.s32.totalorder %v681, 1
        %v844 = vsel %vm843, %v836, %v840
        %v845 = vsel %vm843, %v838, %v842
        %v846 = vsel %vm843, %v840, %v836
        %v847 = vsel %vm843, %v842, %v838
        %v848 = vlaneseq
        %v849 = vshrl.u32 %v848, 7
        %v850 = vsub.s32 2, %v849
        %v851 = vrot.slane %v439, %v850
        %v852 = vlaneseq
        %v853 = vshrl.u32 %v852, 7
        %v854 = vsub.s32 6, %v853
        %v855 = vrot.slane %v439, %v854
        %v858 = vlaneseq
        %v859 = vshrl.u32 %v858, 7
        %v860 = vsub.s32 2, %v859
        %v861 = vrot.slane %v851, %v860
        %v862 = vlaneseq
        %v863 = vshrl.u32 %v862, 7
        %v864 = vsub.s32 2, %v863
        %v865 = vrot.slane %v855, %v864
        %v866 = vmul.f32 %v846, %v861
        %v867 = vmul.f32 %v844, %v865
        %v868 = vmul.f32 %v847, %v861
        %v869 = vmul.f32 %v845, %v865
        %v870 = vadd.f32 %v787, %v866
        %v871 = vadd.f32 %v788, %v867
        %v872 = vadd.f32 %v789, %v868
        %v873 = vadd.f32 %v790, %v869
        %874 = vset.pattern.permute.xlu0 2
        %875 = vperm.xlu0 %874, %v446
        %v876 = vpop.permute.xlu0 %875
        %878 = vset.pattern.permute.xlu0 2
        %879 = vperm.xlu0 %878, %v447
        %v880 = vpop.permute.xlu0 %879
        %v882 = vmul.f32 %v706, %v876
        %v883 = vmul.f32 %v707, %v876
        %v884 = vmul.f32 %v708, %v880
        %v885 = vmul.f32 %v709, %v880
        %886 = vset.pattern.permute.xlu0 5
        %887 = vperm.xlu0 %886, %v446
        %v888 = vpop.permute.xlu0 %887
        %890 = vset.pattern.permute.xlu0 5
        %891 = vperm.xlu0 %890, %v447
        %v892 = vpop.permute.xlu0 %891
        %v894 = vmul.f32 %v668, %v888
        %v895 = vmul.f32 %v669, %v888
        %v896 = vmul.f32 %v670, %v892
        %v897 = vmul.f32 %v671, %v892
        %v898 = vadd.f32 %v882, %v894
        %v899 = vadd.f32 %v883, %v895
        %v900 = vadd.f32 %v884, %v896
        %v901 = vadd.f32 %v885, %v897
        %902 = vset.pattern.permute.xlu0 8
        %903 = vperm.xlu0 %902, %v446
        %v904 = vpop.permute.xlu0 %903
        %906 = vset.pattern.permute.xlu0 8
        %907 = vperm.xlu0 %906, %v447
        %v908 = vpop.permute.xlu0 %907
        %v910 = vmul.f32 %v741, %v904
        %v911 = vmul.f32 %v742, %v904
        %v912 = vmul.f32 %v743, %v908
        %v913 = vmul.f32 %v744, %v908
        %v914 = vadd.f32 %v898, %v910
        %v915 = vadd.f32 %v899, %v911
        %v916 = vadd.f32 %v900, %v912
        %v917 = vadd.f32 %v901, %v913
        %918 = vrot.lane.b32.xlu0 %v914, 127
        %v919 = vpop.permute.xlu0 %918
        %920 = vrot.lane.b32.xlu0 %v916, 127
        %v921 = vpop.permute.xlu0 %920
        %922 = vrot.lane.b32.xlu0 %v915, 127
        %v923 = vpop.permute.xlu0 %922
        %924 = vrot.lane.b32.xlu0 %v917, 127
        %v925 = vpop.permute.xlu0 %924
        %vm926 = vcmp.lt.s32.totalorder %v681, 127
        %v927 = vsel %vm926, %v919, %v923
        %v928 = vsel %vm926, %v921, %v925
        %v929 = vsel %vm926, %v923, %v919
        %v930 = vsel %vm926, %v925, %v921
        %v931 = vlaneseq
        %v932 = vshrl.u32 %v931, 7
        %v933 = vsub.s32 3, %v932
        %v934 = vrot.slane %v439, %v933
        %v935 = vlaneseq
        %v936 = vshrl.u32 %v935, 7
        %v937 = vsub.s32 7, %v936
        %v938 = vrot.slane %v439, %v937
        %v941 = vlaneseq
        %v942 = vshrl.u32 %v941, 7
        %v943 = vsub.s32 3, %v942
        %v944 = vrot.slane %v934, %v943
        %v945 = vlaneseq
        %v946 = vshrl.u32 %v945, 7
        %v947 = vsub.s32 3, %v946
        %v948 = vrot.slane %v938, %v947
        %v949 = vmul.f32 %v927, %v944
        %v950 = vmul.f32 %v929, %v948
        %v951 = vmul.f32 %v928, %v944
        %v952 = vmul.f32 %v930, %v948
        %v953 = vadd.f32 %v870, %v949
        %v954 = vadd.f32 %v871, %v950
        %v955 = vadd.f32 %v872, %v951
        %v956 = vadd.f32 %v873, %v952
        %v957 = vmul.f32 %v953, %v953
        %v958 = vmul.f32 %v954, %v954
        %vm959 = vcmask 1041408
        %v960 = vsel %vm959, %v957, 0.0
        %v961 = vsel %vm959, %v958, 0.0
        %v962 = vadd.f32 %v960, %v961
        %963 = vadd.xlane.f32.xlu0 %v962
        %v964 = vpop.xlane.xlu0 %963
        %v965 = vmax.f32 %v964, 1e-24
        %v966 = vrsqrt.pop %v965
        %v967 = vmul.f32 %v953, %v966
        %v968 = vmul.f32 %v954, %v966
        %vm969 = vcmask 1045508
        %v970 = vsel %vm969, %v957, 0.0
        %v971 = vsel %vm969, %v958, 0.0
        %v972 = vadd.f32 %v970, %v971
        %973 = vadd.xlane.f32.xlu0 %v972
        %v974 = vpop.xlane.xlu0 %973
        %v975 = vmax.f32 %v974, 1e-24
        %v976 = vrsqrt.pop %v975
        %v977 = vmul.f32 %v953, %v976
        %v978 = vmul.f32 %v954, %v976
        %v981 = vrot.slane %v977, 4
        %v982 = vrot.slane %v978, 4
        %985 = vmatprep.subr.mxu0 0.0
        %986 = vmatpush1.xpose.msra.mxu0 0.0
        %987 = vmatprep.subr.mxu0 0.0
        %988 = vmatpush1.xpose.msra.mxu0 0.0
        %989 = vmatprep.subr.mxu0 0.0
        %990 = vmatpush1.xpose.msra.mxu0 0.0
        %991 = vmatprep.subr.mxu0 0.0
        %992 = vmatpush1.xpose.msra.mxu0 0.0
        %993 = vmatprep.subr.mxu0 0.0
        %994 = vmatpush1.xpose.msra.mxu0 0.0
        %995 = vmatprep.subr.mxu0 0.0
        %996 = vmatpush1.xpose.msra.mxu0 0.0
        %997 = vmatprep.subr.mxu0 0.0
        %998 = vmatpush1.xpose.msra.mxu0 0.0
        %999 = vmatprep.subr.mxu0 0.0
        %1000 = vmatpush1.xpose.msra.mxu0 0.0
        %1001 = vmatprep.subr.mxu0 0.0
        %1002 = vmatpush1.xpose.msra.mxu0 0.0
        %1003 = vmatprep.subr.mxu0 0.0
        %1004 = vmatpush1.xpose.msra.mxu0 0.0
        %1005 = vmatprep.subr.mxu0 0.0
        %1006 = vmatpush1.xpose.msra.mxu0 0.0
        %1007 = vmatprep.subr.mxu0 0.0
        %1008 = vmatpush1.xpose.msra.mxu0 0.0
        %1009 = vmatprep.subr.mxu0 0.0
        %1010 = vmatpush1.xpose.msra.mxu0 0.0
        %1011 = vmatprep.subr.mxu0 0.0
        %1012 = vmatpush1.xpose.msra.mxu0 0.0
        %1013 = vmatprep.subr.mxu0 0.0
        %1014 = vmatpush1.xpose.msra.mxu0 0.0
        %1015 = vmatprep.subr.mxu0 %v982
        %1016 = vmatpush1.xpose.msra.mxu0 %v981
        %1017 = vmatprep.subr.mxu0 0.0
        %1018 = vmatpush2.xpose.msra.mxu0 0.0
        %1019 = vmatprep.subr.mxu0 0.0
        %1020 = vmatpush2.xpose.msra.mxu0 0.0
        %1021 = vmatprep.subr.mxu0 0.0
        %1022 = vmatpush2.xpose.msra.mxu0 0.0
        %1023 = vmatprep.subr.mxu0 0.0
        %1024 = vmatpush2.xpose.msra.mxu0 0.0
        %1025 = vmatprep.subr.mxu0 0.0
        %1026 = vmatpush2.xpose.msra.mxu0 0.0
        %1027 = vmatprep.subr.mxu0 0.0
        %1028 = vmatpush2.xpose.msra.mxu0 0.0
        %1029 = vmatprep.subr.mxu0 0.0
        %1030 = vmatpush2.xpose.msra.mxu0 0.0
        %1031 = vmatprep.subr.mxu0 0.0
        %1032 = vmatpush2.xpose.msra.mxu0 0.0
        %1033 = vmatprep.subr.mxu0 0.0
        %1034 = vmatpush2.xpose.msra.mxu0 0.0
        %1035 = vmatprep.subr.mxu0 0.0
        %1036 = vmatpush2.xpose.msra.mxu0 0.0
        %1037 = vmatprep.subr.mxu0 0.0
        %1038 = vmatpush2.xpose.msra.mxu0 0.0
        %1039 = vmatprep.subr.mxu0 0.0
        %1040 = vmatpush2.xpose.msra.mxu0 0.0
        %1041 = vmatprep.subr.mxu0 0.0
        %1042 = vmatpush2.xpose.msra.mxu0 0.0
        %1043 = vmatprep.subr.mxu0 0.0
        %1044 = vmatpush2.xpose.msra.mxu0 0.0
        %1045 = vmatprep.subr.mxu0 0.0
        %1046 = vmatpush2.xpose.msra.mxu0 0.0
        %1047 = vmatprep.subr.mxu0 0.0
        %1048 = vmatpush2.xpose.msra.mxu0 0.0
        %1049 = vmatprep.mubr.f32.mxu0 %v968
        %1050 = vmatmul.mubr.f32.gmra.mxu0 %v967
        %v1051 = vpop.f32.mrf.mxu0
        %v1052 = vadd.f32 0.0, %v1051
        %v1053 = vpop.f32.mrf.mxu0
        %1054 = vdwg.mxu0
        %s1056 = vtos %v448
        %v1057 = vstv %s1056
        %v1059 = vmul.f32 %v1052, %v1057
        %vm1060 = vcmask 9216
        %v1061 = vsel %vm1060, %v1059, -inf
        %1062 = vmax.xlane.f32.xlu0 %v1061
        %v1063 = vpop.xlane.xlu0 %1062
        %v1064 = vsub.f32 %v1059, %v1063
        %v1065 = vmul.f32 %v1064, 1.442695
        %v1066 = vpow.pop %v1065
        %v1067 = vsel %vm1060, %v1066, 0.0
        %1068 = vadd.xlane.f32.xlu0 %v1067
        %v1069 = vpop.xlane.xlu0 %1068
        %v1070 = vrcp.pop %v1069
        %v1071 = vmul.f32 %v1066, %v1070
        %1073 = vset.pattern.permute.xlu0 0
        %1074 = vperm.xlu0 %1073, %v1071
        %v1075 = vpop.permute.xlu0 %1074
        %v1077 = vlaneseq
        %v1078 = vshrl.u32 %v1077, 7
        %v1079 = vsub.s32 0, %v1078
        %v1080 = vrot.slane %v955, %v1079
        %v1081 = vlaneseq
        %v1082 = vshrl.u32 %v1081, 7
        %v1083 = vsub.s32 0, %v1082
        %v1084 = vrot.slane %v956, %v1083
        %v1085 = vmul.f32 %v1075, %v1080
        %v1086 = vmul.f32 %v1075, %v1084
        %1087 = vset.pattern.permute.xlu0 1
        %1088 = vperm.xlu0 %1087, %v1071
        %v1089 = vpop.permute.xlu0 %1088
        %v1091 = vlaneseq
        %v1092 = vshrl.u32 %v1091, 7
        %v1093 = vsub.s32 1, %v1092
        %v1094 = vrot.slane %v955, %v1093
        %v1095 = vlaneseq
        %v1096 = vshrl.u32 %v1095, 7
        %v1097 = vsub.s32 1, %v1096
        %v1098 = vrot.slane %v956, %v1097
        %v1099 = vmul.f32 %v1089, %v1094
        %v1100 = vmul.f32 %v1089, %v1098
        %v1101 = vadd.f32 %v1085, %v1099
        %v1102 = vadd.f32 %v1086, %v1100
        %vm1103 = vcmask 1043458
        %v1104 = vsel %vm1103, %v957, 0.0
        %v1105 = vsel %vm1103, %v958, 0.0
        %v1106 = vadd.f32 %v1104, %v1105
        %1107 = vadd.xlane.f32.xlu0 %v1106
        %v1108 = vpop.xlane.xlu0 %1107
        %v1109 = vmax.f32 %v1108, 1e-24
        %v1110 = vrsqrt.pop %v1109
        %v1111 = vmul.f32 %v953, %v1110
        %v1112 = vmul.f32 %v954, %v1110
        %vm1113 = vcmask 1047558
        %v1114 = vsel %vm1113, %v957, 0.0
        %v1115 = vsel %vm1113, %v958, 0.0
        %v1116 = vadd.f32 %v1114, %v1115
        %1117 = vadd.xlane.f32.xlu0 %v1116
        %v1118 = vpop.xlane.xlu0 %1117
        %v1119 = vmax.f32 %v1118, 1e-24
        %v1120 = vrsqrt.pop %v1119
        %v1121 = vmul.f32 %v953, %v1120
        %v1122 = vmul.f32 %v954, %v1120
        %v1125 = vrot.slane %v1111, 2
        %v1126 = vrot.slane %v1112, 2
        %v1131 = vrot.slane %v1121, 6
        %v1132 = vrot.slane %v1122, 6
        %1135 = vmatprep.subr.mxu0 0.0
        %1136 = vmatpush1.xpose.msra.mxu0 0.0
        %1137 = vmatprep.subr.mxu0 0.0
        %1138 = vmatpush1.xpose.msra.mxu0 0.0
        %1139 = vmatprep.subr.mxu0 0.0
        %1140 = vmatpush1.xpose.msra.mxu0 0.0
        %1141 = vmatprep.subr.mxu0 0.0
        %1142 = vmatpush1.xpose.msra.mxu0 0.0
        %1143 = vmatprep.subr.mxu0 0.0
        %1144 = vmatpush1.xpose.msra.mxu0 0.0
        %1145 = vmatprep.subr.mxu0 0.0
        %1146 = vmatpush1.xpose.msra.mxu0 0.0
        %1147 = vmatprep.subr.mxu0 0.0
        %1148 = vmatpush1.xpose.msra.mxu0 0.0
        %1149 = vmatprep.subr.mxu0 0.0
        %1150 = vmatpush1.xpose.msra.mxu0 0.0
        %1151 = vmatprep.subr.mxu0 0.0
        %1152 = vmatpush1.xpose.msra.mxu0 0.0
        %1153 = vmatprep.subr.mxu0 0.0
        %1154 = vmatpush1.xpose.msra.mxu0 0.0
        %1155 = vmatprep.subr.mxu0 0.0
        %1156 = vmatpush1.xpose.msra.mxu0 0.0
        %1157 = vmatprep.subr.mxu0 0.0
        %1158 = vmatpush1.xpose.msra.mxu0 0.0
        %1159 = vmatprep.subr.mxu0 0.0
        %1160 = vmatpush1.xpose.msra.mxu0 0.0
        %1161 = vmatprep.subr.mxu0 0.0
        %1162 = vmatpush1.xpose.msra.mxu0 0.0
        %1163 = vmatprep.subr.mxu0 0.0
        %1164 = vmatpush1.xpose.msra.mxu0 0.0
        %1165 = vmatprep.subr.mxu0 %v1132
        %1166 = vmatpush1.xpose.msra.mxu0 %v1131
        %1167 = vmatprep.subr.mxu0 0.0
        %1168 = vmatpush2.xpose.msra.mxu0 0.0
        %1169 = vmatprep.subr.mxu0 0.0
        %1170 = vmatpush2.xpose.msra.mxu0 0.0
        %1171 = vmatprep.subr.mxu0 0.0
        %1172 = vmatpush2.xpose.msra.mxu0 0.0
        %1173 = vmatprep.subr.mxu0 0.0
        %1174 = vmatpush2.xpose.msra.mxu0 0.0
        %1175 = vmatprep.subr.mxu0 0.0
        %1176 = vmatpush2.xpose.msra.mxu0 0.0
        %1177 = vmatprep.subr.mxu0 0.0
        %1178 = vmatpush2.xpose.msra.mxu0 0.0
        %1179 = vmatprep.subr.mxu0 0.0
        %1180 = vmatpush2.xpose.msra.mxu0 0.0
        %1181 = vmatprep.subr.mxu0 0.0
        %1182 = vmatpush2.xpose.msra.mxu0 0.0
        %1183 = vmatprep.subr.mxu0 0.0
        %1184 = vmatpush2.xpose.msra.mxu0 0.0
        %1185 = vmatprep.subr.mxu0 0.0
        %1186 = vmatpush2.xpose.msra.mxu0 0.0
        %1187 = vmatprep.subr.mxu0 0.0
        %1188 = vmatpush2.xpose.msra.mxu0 0.0
        %1189 = vmatprep.subr.mxu0 0.0
        %1190 = vmatpush2.xpose.msra.mxu0 0.0
        %1191 = vmatprep.subr.mxu0 0.0
        %1192 = vmatpush2.xpose.msra.mxu0 0.0
        %1193 = vmatprep.subr.mxu0 0.0
        %1194 = vmatpush2.xpose.msra.mxu0 0.0
        %1195 = vmatprep.subr.mxu0 0.0
        %1196 = vmatpush2.xpose.msra.mxu0 0.0
        %1197 = vmatprep.subr.mxu0 0.0
        %1198 = vmatpush2.xpose.msra.mxu0 0.0
        %1199 = vmatprep.mubr.f32.mxu0 %v1126
        %1200 = vmatmul.mubr.f32.gmra.mxu0 %v1125
        %v1201 = vpop.f32.mrf.mxu0
        %v1202 = vadd.f32 0.0, %v1201
        %v1203 = vpop.f32.mrf.mxu0
        %1204 = vdwg.mxu0
        %v1205 = vrot.slane %v448, 1
        %s1206 = vtos %v1205
        %v1207 = vstv %s1206
        %v1209 = vmul.f32 %v1202, %v1207
        %v1210 = vsel %vm1060, %v1209, -inf
        %1211 = vmax.xlane.f32.xlu0 %v1210
        %v1212 = vpop.xlane.xlu0 %1211
        %v1213 = vsub.f32 %v1209, %v1212
        %v1214 = vmul.f32 %v1213, 1.442695
        %v1215 = vpow.pop %v1214
        %v1216 = vsel %vm1060, %v1215, 0.0
        %1217 = vadd.xlane.f32.xlu0 %v1216
        %v1218 = vpop.xlane.xlu0 %1217
        %v1219 = vrcp.pop %v1218
        %v1220 = vmul.f32 %v1215, %v1219
        %1222 = vset.pattern.permute.xlu0 0
        %1223 = vperm.xlu0 %1222, %v1220
        %v1224 = vpop.permute.xlu0 %1223
        %v1226 = vlaneseq
        %v1227 = vshrl.u32 %v1226, 7
        %v1228 = vsub.s32 2, %v1227
        %v1229 = vrot.slane %v955, %v1228
        %v1230 = vlaneseq
        %v1231 = vshrl.u32 %v1230, 7
        %v1232 = vsub.s32 2, %v1231
        %v1233 = vrot.slane %v956, %v1232
        %v1234 = vmul.f32 %v1224, %v1229
        %v1235 = vmul.f32 %v1224, %v1233
        %1236 = vset.pattern.permute.xlu0 1
        %1237 = vperm.xlu0 %1236, %v1220
        %v1238 = vpop.permute.xlu0 %1237
        %v1240 = vlaneseq
        %v1241 = vshrl.u32 %v1240, 7
        %v1242 = vsub.s32 3, %v1241
        %v1243 = vrot.slane %v955, %v1242
        %v1244 = vlaneseq
        %v1245 = vshrl.u32 %v1244, 7
        %v1246 = vsub.s32 3, %v1245
        %v1247 = vrot.slane %v956, %v1246
        %v1248 = vmul.f32 %v1238, %v1243
        %v1249 = vmul.f32 %v1238, %v1247
        %v1250 = vadd.f32 %v1234, %v1248
        %v1251 = vadd.f32 %v1235, %v1249
        %v1254 = vrot.slane %v1250, 6
        %v1255 = vrot.slane %v1251, 6
        %v1258 = vsel %vm959, %v1101, %v1254
        %v1259 = vsel %vm959, %v1102, %v1255
        %1261 = vset.pattern.permute.xlu0 0
        %1262 = vperm.xlu0 %1261, %v449
        %v1263 = vpop.permute.xlu0 %1262
        %v1265 = vlaneseq
        %v1266 = vshrl.u32 %v1265, 7
        %v1267 = vsub.s32 0, %v1266
        %v1268 = vrot.slane %v1258, %v1267
        %v1269 = vlaneseq
        %v1270 = vshrl.u32 %v1269, 7
        %v1271 = vsub.s32 0, %v1270
        %v1272 = vrot.slane %v1259, %v1271
        %v1273 = vmul.f32 %v1263, %v1268
        %v1274 = vmul.f32 %v1263, %v1272
        %1275 = vset.pattern.permute.xlu0 1
        %1276 = vperm.xlu0 %1275, %v449
        %v1277 = vpop.permute.xlu0 %1276
        %v1279 = vlaneseq
        %v1280 = vshrl.u32 %v1279, 7
        %v1281 = vsub.s32 1, %v1280
        %v1282 = vrot.slane %v1258, %v1281
        %v1283 = vlaneseq
        %v1284 = vshrl.u32 %v1283, 7
        %v1285 = vsub.s32 1, %v1284
        %v1286 = vrot.slane %v1259, %v1285
        %v1287 = vmul.f32 %v1277, %v1282
        %v1288 = vmul.f32 %v1277, %v1286
        %v1289 = vadd.f32 %v1273, %v1287
        %v1290 = vadd.f32 %v1274, %v1288
        %1291 = vset.pattern.permute.xlu0 2
        %1292 = vperm.xlu0 %1291, %v449
        %v1293 = vpop.permute.xlu0 %1292
        %v1295 = vlaneseq
        %v1296 = vshrl.u32 %v1295, 7
        %v1297 = vsub.s32 2, %v1296
        %v1298 = vrot.slane %v1258, %v1297
        %v1299 = vlaneseq
        %v1300 = vshrl.u32 %v1299, 7
        %v1301 = vsub.s32 2, %v1300
        %v1302 = vrot.slane %v1259, %v1301
        %v1303 = vmul.f32 %v1293, %v1298
        %v1304 = vmul.f32 %v1293, %v1302
        %v1305 = vadd.f32 %v1289, %v1303
        %v1306 = vadd.f32 %v1290, %v1304
        %1307 = vset.pattern.permute.xlu0 3
        %1308 = vperm.xlu0 %1307, %v449
        %v1309 = vpop.permute.xlu0 %1308
        %v1311 = vlaneseq
        %v1312 = vshrl.u32 %v1311, 7
        %v1313 = vsub.s32 3, %v1312
        %v1314 = vrot.slane %v1258, %v1313
        %v1315 = vlaneseq
        %v1316 = vshrl.u32 %v1315, 7
        %v1317 = vsub.s32 3, %v1316
        %v1318 = vrot.slane %v1259, %v1317
        %v1319 = vmul.f32 %v1309, %v1314
        %v1320 = vmul.f32 %v1309, %v1318
        %v1321 = vadd.f32 %v1305, %v1319
        %v1322 = vadd.f32 %v1306, %v1320
        %v1325 = vcombine.low %v1321, %v1322
        %v1327 = vadd.f32 %v455, %v1325
        %v1329 = vcombine.high %v1327, %v1327
        %v1331 = vsel %vm459, %v1327, 0.0
        %v1332 = vrot.slane %v1331, 4
        %v1333 = vadd.f32 %v1331, %v1332
        %v1334 = vrot.slane %v1333, 2
        %v1335 = vadd.f32 %v1333, %v1334
        %v1336 = vrot.slane %v1335, 1
        %v1337 = vadd.f32 %v1335, %v1336
        %v1338 = vsel %vm459, %v1329, 0.0
        %v1339 = vrot.slane %v1338, 4
        %v1340 = vadd.f32 %v1338, %v1339
        %v1341 = vrot.slane %v1340, 2
        %v1342 = vadd.f32 %v1340, %v1341
        %v1343 = vrot.slane %v1342, 1
        %v1344 = vadd.f32 %v1342, %v1343
        %v1345 = vmul.f32 %v1337, %v474
        %v1346 = vmul.f32 %v1344, %v474
        %v1349 = vcombine.low %v1345, %v1346
        %v1351 = vsub.f32 %v1327, %v1349
        %v1352 = vmul.f32 %v1351, %v1351
        %v1354 = vcombine.high %v1352, %v1352
        %v1356 = vsel %vm459, %v1352, 0.0
        %v1357 = vrot.slane %v1356, 4
        %v1358 = vadd.f32 %v1356, %v1357
        %v1359 = vrot.slane %v1358, 2
        %v1360 = vadd.f32 %v1358, %v1359
        %v1361 = vrot.slane %v1360, 1
        %v1362 = vadd.f32 %v1360, %v1361
        %v1363 = vsel %vm459, %v1354, 0.0
        %v1364 = vrot.slane %v1363, 4
        %v1365 = vadd.f32 %v1363, %v1364
        %v1366 = vrot.slane %v1365, 2
        %v1367 = vadd.f32 %v1365, %v1366
        %v1368 = vrot.slane %v1367, 1
        %v1369 = vadd.f32 %v1367, %v1368
        %v1370 = vmul.f32 %v1362, %v474
        %v1371 = vmul.f32 %v1369, %v474
        %v1372 = vadd.f32 %v1370, 1e-05
        %v1373 = vadd.f32 %v1371, 1e-05
        %v1374 = vrsqrt.pop %v1372
        %v1375 = vrsqrt.pop %v1373
        %v1378 = vcombine.low %v1374, %v1375
        %v1380 = vmul.f32 %v1351, %v1378
        %1382 = vset.pattern.permute.xlu0 0
        %1383 = vperm.xlu0 %1382, %v442
        %v1384 = vpop.permute.xlu0 %1383
        %v1386 = vunpack.c.l.s4 839922192
        %v1387 = vunpack.c.0.s8 %v1386
        %v1388 = vlaneseq
        %v1389 = vshrl.u32 %v1388, 7
        %v1390 = vsub.s32 %v1387, %v1389
        %v1391 = vrot.slane %v1384, %v1390
        %v1393 = vmul.f32 %v1380, %v1391
        %1395 = vset.pattern.permute.xlu0 0
        %1396 = vperm.xlu0 %1395, %v443
        %v1397 = vpop.permute.xlu0 %1396
        %v1399 = vunpack.c.l.s4 839922192
        %v1400 = vunpack.c.0.s8 %v1399
        %v1401 = vlaneseq
        %v1402 = vshrl.u32 %v1401, 7
        %v1403 = vsub.s32 %v1400, %v1402
        %v1404 = vrot.slane %v1397, %v1403
        %v1406 = vadd.f32 %v1393, %v1404
        %1408 = vset.pattern.permute.xlu0 0
        %1409 = vperm.xlu0 %1408, %v450
        %v1410 = vpop.permute.xlu0 %1409
        %1413 = vset.pattern.permute.xlu0 0
        %1414 = vperm.xlu0 %1413, %v451
        %v1415 = vpop.permute.xlu0 %1414
        %v1418 = vlaneseq
        %v1419 = vshrl.u32 %v1418, 7
        %v1420 = vsub.s32 0, %v1419
        %v1421 = vrot.slane %v1406, %v1420
        %v1422 = vlaneseq
        %v1423 = vshrl.u32 %v1422, 7
        %v1424 = vsub.s32 4, %v1423
        %v1425 = vrot.slane %v1406, %v1424
        %v1428 = vlaneseq
        %v1429 = vshrl.u32 %v1428, 7
        %v1430 = vsub.s32 0, %v1429
        %v1431 = vrot.slane %v1421, %v1430
        %v1432 = vlaneseq
        %v1433 = vshrl.u32 %v1432, 7
        %v1434 = vsub.s32 0, %v1433
        %v1435 = vrot.slane %v1425, %v1434
        %v1436 = vmul.f32 %v1410, %v1431
        %v1437 = vmul.f32 %v1410, %v1435
        %v1438 = vmul.f32 %v1415, %v1431
        %v1439 = vmul.f32 %v1415, %v1435
        %1440 = vset.pattern.permute.xlu0 1
        %1441 = vperm.xlu0 %1440, %v450
        %v1442 = vpop.permute.xlu0 %1441
        %1444 = vset.pattern.permute.xlu0 1
        %1445 = vperm.xlu0 %1444, %v451
        %v1446 = vpop.permute.xlu0 %1445
        %v1448 = vlaneseq
        %v1449 = vshrl.u32 %v1448, 7
        %v1450 = vsub.s32 1, %v1449
        %v1451 = vrot.slane %v1406, %v1450
        %v1452 = vlaneseq
        %v1453 = vshrl.u32 %v1452, 7
        %v1454 = vsub.s32 5, %v1453
        %v1455 = vrot.slane %v1406, %v1454
        %v1458 = vlaneseq
        %v1459 = vshrl.u32 %v1458, 7
        %v1460 = vsub.s32 1, %v1459
        %v1461 = vrot.slane %v1451, %v1460
        %v1462 = vlaneseq
        %v1463 = vshrl.u32 %v1462, 7
        %v1464 = vsub.s32 1, %v1463
        %v1465 = vrot.slane %v1455, %v1464
        %v1466 = vmul.f32 %v1442, %v1461
        %v1467 = vmul.f32 %v1442, %v1465
        %v1468 = vmul.f32 %v1446, %v1461
        %v1469 = vmul.f32 %v1446, %v1465
        %v1470 = vadd.f32 %v1436, %v1466
        %v1471 = vadd.f32 %v1437, %v1467
        %v1472 = vadd.f32 %v1438, %v1468
        %v1473 = vadd.f32 %v1439, %v1469
        %1474 = vset.pattern.permute.xlu0 2
        %1475 = vperm.xlu0 %1474, %v450
        %v1476 = vpop.permute.xlu0 %1475
        %1478 = vset.pattern.permute.xlu0 2
        %1479 = vperm.xlu0 %1478, %v451
        %v1480 = vpop.permute.xlu0 %1479
        %v1482 = vlaneseq
        %v1483 = vshrl.u32 %v1482, 7
        %v1484 = vsub.s32 2, %v1483
        %v1485 = vrot.slane %v1406, %v1484
        %v1486 = vlaneseq
        %v1487 = vshrl.u32 %v1486, 7
        %v1488 = vsub.s32 6, %v1487
        %v1489 = vrot.slane %v1406, %v1488
        %v1492 = vlaneseq
        %v1493 = vshrl.u32 %v1492, 7
        %v1494 = vsub.s32 2, %v1493
        %v1495 = vrot.slane %v1485, %v1494
        %v1496 = vlaneseq
        %v1497 = vshrl.u32 %v1496, 7
        %v1498 = vsub.s32 2, %v1497
        %v1499 = vrot.slane %v1489, %v1498
        %v1500 = vmul.f32 %v1476, %v1495
        %v1501 = vmul.f32 %v1476, %v1499
        %v1502 = vmul.f32 %v1480, %v1495
        %v1503 = vmul.f32 %v1480, %v1499
        %v1504 = vadd.f32 %v1470, %v1500
        %v1505 = vadd.f32 %v1471, %v1501
        %v1506 = vadd.f32 %v1472, %v1502
        %v1507 = vadd.f32 %v1473, %v1503
        %1508 = vset.pattern.permute.xlu0 3
        %1509 = vperm.xlu0 %1508, %v450
        %v1510 = vpop.permute.xlu0 %1509
        %1512 = vset.pattern.permute.xlu0 3
        %1513 = vperm.xlu0 %1512, %v451
        %v1514 = vpop.permute.xlu0 %1513
        %v1516 = vlaneseq
        %v1517 = vshrl.u32 %v1516, 7
        %v1518 = vsub.s32 3, %v1517
        %v1519 = vrot.slane %v1406, %v1518
        %v1520 = vlaneseq
        %v1521 = vshrl.u32 %v1520, 7
        %v1522 = vsub.s32 7, %v1521
        %v1523 = vrot.slane %v1406, %v1522
        %v1526 = vlaneseq
        %v1527 = vshrl.u32 %v1526, 7
        %v1528 = vsub.s32 3, %v1527
        %v1529 = vrot.slane %v1519, %v1528
        %v1530 = vlaneseq
        %v1531 = vshrl.u32 %v1530, 7
        %v1532 = vsub.s32 3, %v1531
        %v1533 = vrot.slane %v1523, %v1532
        %v1534 = vmul.f32 %v1510, %v1529
        %v1535 = vmul.f32 %v1510, %v1533
        %v1536 = vmul.f32 %v1514, %v1529
        %v1537 = vmul.f32 %v1514, %v1533
        %v1538 = vadd.f32 %v1504, %v1534
        %v1539 = vadd.f32 %v1505, %v1535
        %v1540 = vadd.f32 %v1506, %v1536
        %v1541 = vadd.f32 %v1507, %v1537
        %1542 = vrot.lane.b32.xlu0 %v1538, 16
        %v1543 = vpop.permute.xlu0 %1542
        %1544 = vrot.lane.b32.xlu0 %v1540, 16
        %v1545 = vpop.permute.xlu0 %1544
        %1546 = vrot.lane.b32.xlu0 %v1539, 16
        %v1547 = vpop.permute.xlu0 %1546
        %1548 = vrot.lane.b32.xlu0 %v1541, 16
        %v1549 = vpop.permute.xlu0 %1548
        %v1550 = vsel %vm682, %v1543, %v1547
        %v1551 = vsel %vm682, %v1545, %v1549
        %v1552 = vsel %vm682, %v1547, %v1543
        %v1553 = vsel %vm682, %v1549, %v1545
        %v1554 = vmul.f32 %v1552, %v701
        %v1555 = vmul.f32 %v1550, %v705
        %v1556 = vmul.f32 %v1553, %v701
        %v1557 = vmul.f32 %v1551, %v705
        %1558 = vrot.lane.b32.xlu0 %v1538, 112
        %v1559 = vpop.permute.xlu0 %1558
        %1560 = vrot.lane.b32.xlu0 %v1540, 112
        %v1561 = vpop.permute.xlu0 %1560
        %1562 = vrot.lane.b32.xlu0 %v1539, 112
        %v1563 = vpop.permute.xlu0 %1562
        %1564 = vrot.lane.b32.xlu0 %v1541, 112
        %v1565 = vpop.permute.xlu0 %1564
        %v1566 = vsel %vm718, %v1559, %v1563
        %v1567 = vsel %vm718, %v1561, %v1565
        %v1568 = vsel %vm718, %v1563, %v1559
        %v1569 = vsel %vm718, %v1565, %v1561
        %v1570 = vmul.f32 %v1566, %v736
        %v1571 = vmul.f32 %v1568, %v740
        %v1572 = vmul.f32 %v1567, %v736
        %v1573 = vmul.f32 %v1569, %v740
        %1575 = vset.pattern.permute.xlu0 1
        %1576 = vperm.xlu0 %1575, %v452
        %v1577 = vpop.permute.xlu0 %1576
        %1580 = vset.pattern.permute.xlu0 1
        %1581 = vperm.xlu0 %1580, %v453
        %v1582 = vpop.permute.xlu0 %1581
        %v1584 = vmul.f32 %v1554, %v1577
        %v1585 = vmul.f32 %v1555, %v1577
        %v1586 = vmul.f32 %v1556, %v1582
        %v1587 = vmul.f32 %v1557, %v1582
        %1588 = vset.pattern.permute.xlu0 4
        %1589 = vperm.xlu0 %1588, %v452
        %v1590 = vpop.permute.xlu0 %1589
        %1592 = vset.pattern.permute.xlu0 4
        %1593 = vperm.xlu0 %1592, %v453
        %v1594 = vpop.permute.xlu0 %1593
        %v1596 = vmul.f32 %v1538, %v1590
        %v1597 = vmul.f32 %v1539, %v1590
        %v1598 = vmul.f32 %v1540, %v1594
        %v1599 = vmul.f32 %v1541, %v1594
        %v1600 = vadd.f32 %v1584, %v1596
        %v1601 = vadd.f32 %v1585, %v1597
        %v1602 = vadd.f32 %v1586, %v1598
        %v1603 = vadd.f32 %v1587, %v1599
        %1604 = vset.pattern.permute.xlu0 7
        %1605 = vperm.xlu0 %1604, %v452
        %v1606 = vpop.permute.xlu0 %1605
        %1608 = vset.pattern.permute.xlu0 7
        %1609 = vperm.xlu0 %1608, %v453
        %v1610 = vpop.permute.xlu0 %1609
        %v1612 = vmul.f32 %v1570, %v1606
        %v1613 = vmul.f32 %v1571, %v1606
        %v1614 = vmul.f32 %v1572, %v1610
        %v1615 = vmul.f32 %v1573, %v1610
        %v1616 = vadd.f32 %v1600, %v1612
        %v1617 = vadd.f32 %v1601, %v1613
        %v1618 = vadd.f32 %v1602, %v1614
        %v1619 = vadd.f32 %v1603, %v1615
        %1620 = vset.pattern.permute.xlu0 0
        %1621 = vperm.xlu0 %1620, %v452
        %v1622 = vpop.permute.xlu0 %1621
        %1624 = vset.pattern.permute.xlu0 0
        %1625 = vperm.xlu0 %1624, %v453
        %v1626 = vpop.permute.xlu0 %1625
        %v1628 = vmul.f32 %v1554, %v1622
        %v1629 = vmul.f32 %v1555, %v1622
        %v1630 = vmul.f32 %v1556, %v1626
        %v1631 = vmul.f32 %v1557, %v1626
        %1632 = vset.pattern.permute.xlu0 3
        %1633 = vperm.xlu0 %1632, %v452
        %v1634 = vpop.permute.xlu0 %1633
        %1636 = vset.pattern.permute.xlu0 3
        %1637 = vperm.xlu0 %1636, %v453
        %v1638 = vpop.permute.xlu0 %1637
        %v1640 = vmul.f32 %v1538, %v1634
        %v1641 = vmul.f32 %v1539, %v1634
        %v1642 = vmul.f32 %v1540, %v1638
        %v1643 = vmul.f32 %v1541, %v1638
        %v1644 = vadd.f32 %v1628, %v1640
        %v1645 = vadd.f32 %v1629, %v1641
        %v1646 = vadd.f32 %v1630, %v1642
        %v1647 = vadd.f32 %v1631, %v1643
        %1648 = vset.pattern.permute.xlu0 6
        %1649 = vperm.xlu0 %1648, %v452
        %v1650 = vpop.permute.xlu0 %1649
        %1652 = vset.pattern.permute.xlu0 6
        %1653 = vperm.xlu0 %1652, %v453
        %v1654 = vpop.permute.xlu0 %1653
        %v1656 = vmul.f32 %v1570, %v1650
        %v1657 = vmul.f32 %v1571, %v1650
        %v1658 = vmul.f32 %v1572, %v1654
        %v1659 = vmul.f32 %v1573, %v1654
        %v1660 = vadd.f32 %v1644, %v1656
        %v1661 = vadd.f32 %v1645, %v1657
        %v1662 = vadd.f32 %v1646, %v1658
        %v1663 = vadd.f32 %v1647, %v1659
        %1664 = vrot.lane.b32.xlu0 %v1660, 1
        %v1665 = vpop.permute.xlu0 %1664
        %1666 = vrot.lane.b32.xlu0 %v1662, 1
        %v1667 = vpop.permute.xlu0 %1666
        %1668 = vrot.lane.b32.xlu0 %v1661, 1
        %v1669 = vpop.permute.xlu0 %1668
        %1670 = vrot.lane.b32.xlu0 %v1663, 1
        %v1671 = vpop.permute.xlu0 %1670
        %v1672 = vsel %vm843, %v1665, %v1669
        %v1673 = vsel %vm843, %v1667, %v1671
        %v1674 = vsel %vm843, %v1669, %v1665
        %v1675 = vsel %vm843, %v1671, %v1667
        %v1676 = vmul.f32 %v1674, %v861
        %v1677 = vmul.f32 %v1672, %v865
        %v1678 = vmul.f32 %v1675, %v861
        %v1679 = vmul.f32 %v1673, %v865
        %v1680 = vadd.f32 %v1616, %v1676
        %v1681 = vadd.f32 %v1617, %v1677
        %v1682 = vadd.f32 %v1618, %v1678
        %v1683 = vadd.f32 %v1619, %v1679
        %1684 = vset.pattern.permute.xlu0 2
        %1685 = vperm.xlu0 %1684, %v452
        %v1686 = vpop.permute.xlu0 %1685
        %1688 = vset.pattern.permute.xlu0 2
        %1689 = vperm.xlu0 %1688, %v453
        %v1690 = vpop.permute.xlu0 %1689
        %v1692 = vmul.f32 %v1554, %v1686
        %v1693 = vmul.f32 %v1555, %v1686
        %v1694 = vmul.f32 %v1556, %v1690
        %v1695 = vmul.f32 %v1557, %v1690
        %1696 = vset.pattern.permute.xlu0 5
        %1697 = vperm.xlu0 %1696, %v452
        %v1698 = vpop.permute.xlu0 %1697
        %1700 = vset.pattern.permute.xlu0 5
        %1701 = vperm.xlu0 %1700, %v453
        %v1702 = vpop.permute.xlu0 %1701
        %v1704 = vmul.f32 %v1538, %v1698
        %v1705 = vmul.f32 %v1539, %v1698
        %v1706 = vmul.f32 %v1540, %v1702
        %v1707 = vmul.f32 %v1541, %v1702
        %v1708 = vadd.f32 %v1692, %v1704
        %v1709 = vadd.f32 %v1693, %v1705
        %v1710 = vadd.f32 %v1694, %v1706
        %v1711 = vadd.f32 %v1695, %v1707
        %1712 = vset.pattern.permute.xlu0 8
        %1713 = vperm.xlu0 %1712, %v452
        %v1714 = vpop.permute.xlu0 %1713
        %1716 = vset.pattern.permute.xlu0 8
        %1717 = vperm.xlu0 %1716, %v453
        %v1718 = vpop.permute.xlu0 %1717
        %v1720 = vmul.f32 %v1570, %v1714
        %v1721 = vmul.f32 %v1571, %v1714
        %v1722 = vmul.f32 %v1572, %v1718
        %v1723 = vmul.f32 %v1573, %v1718
        %v1724 = vadd.f32 %v1708, %v1720
        %v1725 = vadd.f32 %v1709, %v1721
        %v1726 = vadd.f32 %v1710, %v1722
        %v1727 = vadd.f32 %v1711, %v1723
        %1728 = vrot.lane.b32.xlu0 %v1724, 127
        %v1729 = vpop.permute.xlu0 %1728
        %1730 = vrot.lane.b32.xlu0 %v1726, 127
        %v1731 = vpop.permute.xlu0 %1730
        %1732 = vrot.lane.b32.xlu0 %v1725, 127
        %v1733 = vpop.permute.xlu0 %1732
        %1734 = vrot.lane.b32.xlu0 %v1727, 127
        %v1735 = vpop.permute.xlu0 %1734
        %v1736 = vsel %vm926, %v1729, %v1733
        %v1737 = vsel %vm926, %v1731, %v1735
        %v1738 = vsel %vm926, %v1733, %v1729
        %v1739 = vsel %vm926, %v1735, %v1731
        %v1740 = vmul.f32 %v1736, %v944
        %v1741 = vmul.f32 %v1738, %v948
        %v1742 = vmul.f32 %v1737, %v944
        %v1743 = vmul.f32 %v1739, %v948
        %v1744 = vadd.f32 %v1680, %v1740
        %v1745 = vadd.f32 %v1681, %v1741
        %v1746 = vadd.f32 %v1682, %v1742
        %v1747 = vadd.f32 %v1683, %v1743
        %v1748 = vmul.f32 %v1744, 0.5
        %v1749 = vmul.f32 %v1745, 0.5
        %v1750 = vmul.f32 %v1744, 0.70710677
        %v1751 = vmul.f32 %v1745, 0.70710677
        %v1752 = verf.f32.pop %v1750
        %v1753 = verf.f32.pop %v1751
        %v1754 = vadd.f32 %v1752, 1.0
        %v1755 = vadd.f32 %v1753, 1.0
        %v1756 = vmul.f32 %v1748, %v1754
        %v1757 = vmul.f32 %v1749, %v1755
        %v1758 = vmul.f32 %v1756, %v1746
        %v1759 = vmul.f32 %v1757, %v1747
        %1761 = vset.pattern.permute.xlu0 0
        %1762 = vperm.xlu0 %1761, %v454
        %v1763 = vpop.permute.xlu0 %1762
        %v1765 = vlaneseq
        %v1766 = vshrl.u32 %v1765, 7
        %v1767 = vsub.s32 0, %v1766
        %v1768 = vrot.slane %v1758, %v1767
        %v1769 = vlaneseq
        %v1770 = vshrl.u32 %v1769, 7
        %v1771 = vsub.s32 0, %v1770
        %v1772 = vrot.slane %v1759, %v1771
        %v1773 = vmul.f32 %v1763, %v1768
        %v1774 = vmul.f32 %v1763, %v1772
        %1775 = vset.pattern.permute.xlu0 1
        %1776 = vperm.xlu0 %1775, %v454
        %v1777 = vpop.permute.xlu0 %1776
        %v1779 = vlaneseq
        %v1780 = vshrl.u32 %v1779, 7
        %v1781 = vsub.s32 1, %v1780
        %v1782 = vrot.slane %v1758, %v1781
        %v1783 = vlaneseq
        %v1784 = vshrl.u32 %v1783, 7
        %v1785 = vsub.s32 1, %v1784
        %v1786 = vrot.slane %v1759, %v1785
        %v1787 = vmul.f32 %v1777, %v1782
        %v1788 = vmul.f32 %v1777, %v1786
        %v1789 = vadd.f32 %v1773, %v1787
        %v1790 = vadd.f32 %v1774, %v1788
        %1791 = vset.pattern.permute.xlu0 2
        %1792 = vperm.xlu0 %1791, %v454
        %v1793 = vpop.permute.xlu0 %1792
        %v1795 = vlaneseq
        %v1796 = vshrl.u32 %v1795, 7
        %v1797 = vsub.s32 2, %v1796
        %v1798 = vrot.slane %v1758, %v1797
        %v1799 = vlaneseq
        %v1800 = vshrl.u32 %v1799, 7
        %v1801 = vsub.s32 2, %v1800
        %v1802 = vrot.slane %v1759, %v1801
        %v1803 = vmul.f32 %v1793, %v1798
        %v1804 = vmul.f32 %v1793, %v1802
        %v1805 = vadd.f32 %v1789, %v1803
        %v1806 = vadd.f32 %v1790, %v1804
        %1807 = vset.pattern.permute.xlu0 3
        %1808 = vperm.xlu0 %1807, %v454
        %v1809 = vpop.permute.xlu0 %1808
        %v1811 = vlaneseq
        %v1812 = vshrl.u32 %v1811, 7
        %v1813 = vsub.s32 3, %v1812
        %v1814 = vrot.slane %v1758, %v1813
        %v1815 = vlaneseq
        %v1816 = vshrl.u32 %v1815, 7
        %v1817 = vsub.s32 3, %v1816
        %v1818 = vrot.slane %v1759, %v1817
        %v1819 = vmul.f32 %v1809, %v1814
        %v1820 = vmul.f32 %v1809, %v1818
        %v1821 = vadd.f32 %v1805, %v1819
        %v1822 = vadd.f32 %v1806, %v1820
        %1823 = vset.pattern.permute.xlu0 4
        %1824 = vperm.xlu0 %1823, %v454
        %v1825 = vpop.permute.xlu0 %1824
        %v1827 = vlaneseq
        %v1828 = vshrl.u32 %v1827, 7
        %v1829 = vsub.s32 4, %v1828
        %v1830 = vrot.slane %v1758, %v1829
        %v1831 = vlaneseq
        %v1832 = vshrl.u32 %v1831, 7
        %v1833 = vsub.s32 4, %v1832
        %v1834 = vrot.slane %v1759, %v1833
        %v1835 = vmul.f32 %v1825, %v1830
        %v1836 = vmul.f32 %v1825, %v1834
        %v1837 = vadd.f32 %v1821, %v1835
        %v1838 = vadd.f32 %v1822, %v1836
        %1839 = vset.pattern.permute.xlu0 5
        %1840 = vperm.xlu0 %1839, %v454
        %v1841 = vpop.permute.xlu0 %1840
        %v1843 = vlaneseq
        %v1844 = vshrl.u32 %v1843, 7
        %v1845 = vsub.s32 5, %v1844
        %v1846 = vrot.slane %v1758, %v1845
        %v1847 = vlaneseq
        %v1848 = vshrl.u32 %v1847, 7
        %v1849 = vsub.s32 5, %v1848
        %v1850 = vrot.slane %v1759, %v1849
        %v1851 = vmul.f32 %v1841, %v1846
        %v1852 = vmul.f32 %v1841, %v1850
        %v1853 = vadd.f32 %v1837, %v1851
        %v1854 = vadd.f32 %v1838, %v1852
        %1855 = vset.pattern.permute.xlu0 6
        %1856 = vperm.xlu0 %1855, %v454
        %v1857 = vpop.permute.xlu0 %1856
        %v1859 = vlaneseq
        %v1860 = vshrl.u32 %v1859, 7
        %v1861 = vsub.s32 6, %v1860
        %v1862 = vrot.slane %v1758, %v1861
        %v1863 = vlaneseq
        %v1864 = vshrl.u32 %v1863, 7
        %v1865 = vsub.s32 6, %v1864
        %v1866 = vrot.slane %v1759, %v1865
        %v1867 = vmul.f32 %v1857, %v1862
        %v1868 = vmul.f32 %v1857, %v1866
        %v1869 = vadd.f32 %v1853, %v1867
        %v1870 = vadd.f32 %v1854, %v1868
        %1871 = vset.pattern.permute.xlu0 7
        %1872 = vperm.xlu0 %1871, %v454
        %v1873 = vpop.permute.xlu0 %1872
        %v1875 = vlaneseq
        %v1876 = vshrl.u32 %v1875, 7
        %v1877 = vsub.s32 7, %v1876
        %v1878 = vrot.slane %v1758, %v1877
        %v1879 = vlaneseq
        %v1880 = vshrl.u32 %v1879, 7
        %v1881 = vsub.s32 7, %v1880
        %v1882 = vrot.slane %v1759, %v1881
        %v1883 = vmul.f32 %v1873, %v1878
        %v1884 = vmul.f32 %v1873, %v1882
        %v1885 = vadd.f32 %v1869, %v1883
        %v1886 = vadd.f32 %v1870, %v1884
        %v1889 = vcombine.low %v1885, %v1886
        %v1891 = vadd.f32 %v1327, %v1889
        %1892 = vst [vmem:[%s433] sm:$0xff] %v1891
        %s1893 = sand.u32 %s313, 1
        %s1894 = scalar_lea.sflag [#allocation3], %s1893
        %s1895 = sand.u32 %s313, 1
        %s1896 = smul.addr %s1895, 8
        %s1897 = scalar_lea.vmem [#allocation2], %s1896
        // Predicated region
        $region73: #{tpu_custom_call.1} parent=71 // pred_check
          %p1898 = pneg %p323
        $region74: #{tpu_custom_call.1} parent=71 // pred_check_branch
          %1900 = sbr.rel (%p1898) target = $region76
        $region75: #{tpu_custom_call.1} parent=71 // pred_region
          %s1902 = ssub.s32 128, 128
          %1903 = vsyncadd %s1894, %s1902
          %s1904 = smul.addr %s27, 2
          %s1905 = smul.addr %s1904, 64
          %s1906 = scalar_lea.hbm %s13, %s1905
          %s1908 = sshll.u32 %s1897, 4
          %s1909 = int_to_ptr.vmem [resolvable:$true] %s1908
          %1911 = dma.vmem_to_hbm [thread:$0]  %s1909, 128, %s1906, %s1894
        $region76: #{tpu_custom_call.1} parent=71 // pred_fallthru
          _
      $region72: #{tpu_custom_call.1} parent=5 // pred_fallthru
        _
      %p1912 = scmp.le.s32.totalorder 2, %s22
      // Predicated region
      $region77: #{tpu_custom_call.1} parent=5 // pred_check
        %p1913 = pneg %p1912
      $region78: #{tpu_custom_call.1} parent=5 // pred_check_branch
        %1915 = sbr.rel (%p1913) target = $region80
      $region79: #{tpu_custom_call.1} parent=5 // pred_region
        %s1916 = ssub.s32 %s22, 2
        // Predicated region
        $region81: #{tpu_custom_call.1} parent=79 // pred_check
          %p1917 = pneg %p329
        $region82: #{tpu_custom_call.1} parent=79 // pred_check_branch
          %1919 = sbr.rel (%p1917) target = $region84
        $region83: #{tpu_custom_call.1} parent=79 // pred_region
          %s1920 = sand.u32 %s314, 1
          %s1921 = scalar_lea.sflag [#allocation3], %s1920
          %s1922 = sand.u32 %s314, 1
          %s1923 = smul.addr %s1922, 8
          %s1924 = scalar_lea.vmem [#allocation2], %s1923
          %1925 = dma.done %s1921, 128
        $region84: #{tpu_custom_call.1} parent=79 // pred_fallthru
          _
      $region80: #{tpu_custom_call.1} parent=5 // pred_fallthru
        _
    $region6: #{tpu_custom_call.1} parent=1 // loop_footer
      %s26 = sadd.s32 1, %s22
    $region7: #{tpu_custom_call.1} parent=1 // loop_footer_branch
      %21 = sbr.rel target = $region3
    $region8: #{tpu_custom_call.1} parent=1 // loop_exit
      _
    %1926 = vsyncpa [#allocation3], 1
    %s1927 = scalar_lea.sflag [#allocation3], 1
    %1928 = vsyncpa %s1927, 1

</llo_original>
